<compile_context>
chip_gen: v5e
topology: v5e:2x2
jax: 0.10.0
libtpu: 0.0.40
codegen_flags: <defaults>
</compile_context>

<pallas_src>
import functools

import numpy as np
import jax
import jax.numpy as jnp
from jax.experimental import pallas as pl
from jax.experimental.pallas import tpu as pltpu  # noqa: F401  (TPU backend)


# ----------------------------- configuration -----------------------------
VOCAB_SIZE = 32
EMBED_DIM = 32
NUM_HEADS = 4
HIDDEN_DIM = 64
NUM_LAYERS = 2
BATCH = 2
SEQ = 8
LN_EPS = 1e-5

QD = EMBED_DIM // NUM_HEADS
VS_PAD = 40                    # vocab(32) + segments(3), padded to a multiple of 8
TBL_ROWS = VS_PAD + SEQ        # combined embedding table + doubled PE rows
HEAD_COLS = 128                # lane-dense merged MLM+NSP head output width
VEC_ROWS_PER_LAYER = 8         # rows per layer in the small-vector slab


# ------------------------------- utilities -------------------------------
def positional_encoding(seq_len: int, embedding_dim: int) -> np.ndarray:
    # exact reproduction of the reference formula (note the unusual exponents)
    pe = np.zeros((seq_len, embedding_dim), dtype=np.float64)
    for pos in range(seq_len):
        for i in range(0, embedding_dim, 2):
            pe[pos, i] = np.sin(pos / 10000.0 ** (2 * i / embedding_dim))
            pe[pos, i + 1] = np.cos(pos / 10000.0 ** (2 * (i + 1) / embedding_dim))
    return pe.astype(np.float32)


def _layer_norm(v, gamma, beta, eps=LN_EPS):
    mu = jnp.mean(v, axis=-1, keepdims=True)
    var = jnp.mean((v - mu) ** 2, axis=-1, keepdims=True)
    return (v - mu) * jax.lax.rsqrt(var + eps) * gamma + beta


# ------------------------- fused forward kernel ---------------------------
def bert_forward_kernel(
    ids_ref,     # (B*S, 2) int32: [:,0]=token id, [:,1]=segment id (flat)
    tokbs_ref,   # (B, S)   int32: token ids (lanes layout, for pad-mask build)
    tbl_ref,     # (TBL_ROWS, D) f32: rows 0..39 combined embedding, 40..47 = 2*PE
    wslab_ref,   # (L+1, 128, 128) f32: per-layer weights + merged output head
    vslab_ref,   # (L*8, 128) f32: per-layer biases / LayerNorm params
    out_ref,     # (B*S, 128) f32: cols 0..V-1 MLM logits, V..V+1 NSP logits
    *, num_heads: int, num_layers: int, batch: int, seq: int,
    embed_dim: int, hidden_dim: int,
):
    D, Hd = embed_dim, hidden_dim
    qd = D // num_heads
    N = batch * seq
    inv_scale = jnp.float32(1.0 / (qd ** 0.5))

    # ---- fused embedding lookup: one-hot (token ++ segment) matmul on MXU ----
    ids = ids_ref[...]                                     # (N, 2) int32
    tok = ids[:, 0:1]                                      # (N, 1)
    segv = ids[:, 1:2] + VOCAB_SIZE                        # segment rows at [V, V+3)
    lane = jax.lax.broadcasted_iota(jnp.int32, (N, VS_PAD), 1)
    onehot = jnp.where(jnp.logical_or(lane == tok, lane == segv),
                       jnp.float32(1.0), jnp.float32(0.0))  # (N, VS_PAD)
    emb = jnp.dot(onehot, tbl_ref[0:VS_PAD, :],
                  preferred_element_type=jnp.float32)       # (N, D) = tok_emb + seg_emb
    pe2 = tbl_ref[VS_PAD:VS_PAD + seq, :]                   # (S, D) == 2 * PE
    h = (emb.reshape(batch, seq, D) + pe2[None, :, :]).reshape(N, D)

    # ---- additive pad mask (token id == 0 -> -1e9), built in-kernel --------
    tok_bs = tokbs_ref[...]                                 # (B, S) int32
    am = jnp.where(tok_bs == 0, jnp.float32(-1.0e9), jnp.float32(0.0))
    am3 = am[:, None, :]                                    # (B, 1, S); reused everywhere

    # ---- encoder layers (statically unrolled) ------------------------------
    for li in range(num_layers):
        wqkv = wslab_ref[li, 0:D, 0:3 * D]                  # (D, 3D)
        wo = wslab_ref[li, 0:D, 3 * D:4 * D]                # (D, D)
        w1 = wslab_ref[li, D:2 * D, 0:Hd]                   # (D, H)
        w2 = wslab_ref[li, 2 * D:2 * D + Hd, 0:D]           # (H, D)
        r = li * VEC_ROWS_PER_LAYER
        bqkv = vslab_ref[r + 0:r + 1, 0:3 * D]              # (1, 3D)
        b1 = vslab_ref[r + 1:r + 2, 0:Hd]                   # (1, H)
        bo = vslab_ref[r + 2:r + 3, 0:D]                    # (1, D)
        b2 = vslab_ref[r + 3:r + 4, 0:D]
        g1 = vslab_ref[r + 4:r + 5, 0:D]
        be1 = vslab_ref[r + 5:r + 6, 0:D]
        g2 = vslab_ref[r + 6:r + 7, 0:D]
        be2 = vslab_ref[r + 7:r + 8, 0:D]

        # Fused Q/K/V projection: one (B*S, D) x (D, 3D) matmul.
        qkv = (jnp.dot(h, wqkv, preferred_element_type=jnp.float32)
               + bqkv)                                      # (N, 3D)

        acc = jnp.zeros((N, D), dtype=jnp.float32)
        for hd in range(num_heads):                         # static unrolled heads
            lo = hd * qd
            qh = qkv[:, lo:lo + qd].reshape(batch, seq, qd)
            kh = qkv[:, D + lo:D + lo + qd].reshape(batch, seq, qd)
            vh = qkv[:, 2 * D + lo:2 * D + lo + qd].reshape(batch, seq, qd)

            s = (jnp.einsum('bqd,bkd->bqk', qh, kh,
                            preferred_element_type=jnp.float32)
                 * inv_scale + am3)                         # additive pad mask
            m = jnp.max(s, axis=-1, keepdims=True)
            e = jnp.exp(s - m)
            p = e * pl.reciprocal(jnp.sum(e, axis=-1, keepdims=True),
                                  approx=False)
            ctx = jnp.einsum('bqk,bkd->bqd', p, vh,
                             preferred_element_type=jnp.float32)
            # concat(heads) @ Wo == sum_h head_h @ Wo[h*qd:(h+1)*qd, :]
            acc = acc + jnp.dot(ctx.reshape(N, qd), wo[lo:lo + qd, :],
                                preferred_element_type=jnp.float32)
        mha = acc + bo

        # residual + layernorm (dropout == identity)
        r1 = _layer_norm(h + mha, g1, be1)

        # feed-forward
        ff1 = jnp.maximum(
            jnp.dot(r1, w1, preferred_element_type=jnp.float32) + b1, 0.0)
        ff2 = jnp.dot(ff1, w2, preferred_element_type=jnp.float32) + b2
        h = _layer_norm(r1 + ff2, g2, be2)

    # ---- merged MLM+NSP head: one matmul, lane-dense unmasked store --------
    head_w = wslab_ref[num_layers, 0:D, :]                  # (D, 128)
    head_b = wslab_ref[num_layers, D:D + 1, :]              # (1, 128)
    out_ref[...] = (jnp.dot(h, head_w, preferred_element_type=jnp.float32)
                    + head_b)


def fused_bert_forward(ids, tok_bs, packed):
    B, S = tok_bs.shape
    N = B * S
    kernel = functools.partial(
        bert_forward_kernel,
        num_heads=NUM_HEADS, num_layers=NUM_LAYERS,
        batch=B, seq=S, embed_dim=EMBED_DIM, hidden_dim=HIDDEN_DIM)
    # Single gridless pallas_call: all slabs + activations live in VMEM for the
    # whole forward (total footprint << 1 MiB on any TPU generation).
    return pl.pallas_call(
        kernel,
        out_shape=jax.ShapeDtypeStruct((N, HEAD_COLS), jnp.float32),
    )(ids, tok_bs, packed['tbl'], packed['wslab'], packed['vslab'])


# ------------------------------ parameters --------------------------------
def init_params(key):
    def dense(k, din, dout):
        kw, kb = jax.random.split(k)
        w = jax.random.normal(kw, (din, dout), jnp.float32) * 0.05
        b = jax.random.normal(kb, (1, dout), jnp.float32) * 0.05
        return w, b

    keys = jax.random.split(key, 4 + NUM_LAYERS)
    tok = jax.random.normal(keys[0], (VOCAB_SIZE, EMBED_DIM), jnp.float32) * 0.05
    tok = tok.at[0].set(0.0)                   # nn.Embedding padding_idx = 0
    seg = jax.random.normal(keys[1], (3, EMBED_DIM), jnp.float32) * 0.05
    seg = seg.at[0].set(0.0)                   # padding_idx = 0

    layers = []
    for li in range(NUM_LAYERS):
        lk = jax.random.split(keys[4 + li], 6)
        wq, bq = dense(lk[0], EMBED_DIM, EMBED_DIM)   # per-head q/k/v stacked
        wk, bk = dense(lk[1], EMBED_DIM, EMBED_DIM)
        wv, bv = dense(lk[2], EMBED_DIM, EMBED_DIM)
        wo, bo = dense(lk[3], EMBED_DIM, EMBED_DIM)
        w1, b1 = dense(lk[4], EMBED_DIM, HIDDEN_DIM)
        w2, b2 = dense(lk[5], HIDDEN_DIM, EMBED_DIM)
        layers.append(dict(
            wqkv=jnp.concatenate([wq, wk, wv], axis=1),   # (D, 3D)
            bqkv=jnp.concatenate([bq, bk, bv], axis=1),   # (1, 3D)
            wo=wo, bo=bo, w1=w1, b1=b1, w2=w2, b2=b2))

    mlm_w, mlm_b = dense(keys[2], EMBED_DIM, VOCAB_SIZE)
    nsp_w, nsp_b = dense(keys[3], EMBED_DIM, 2)
    return dict(tok=tok, seg=seg, layers=layers,
                mlm_w=mlm_w, mlm_b=mlm_b, nsp_w=nsp_w, nsp_b=nsp_b)


def pack_params(p):
    """Pack all parameters into 3 VMEM-friendly slabs (few, lane-dense DMAs)."""
    D, Hd, V, L = EMBED_DIM, HIDDEN_DIM, VOCAB_SIZE, NUM_LAYERS

    # combined embedding table (rows 0..V-1 token, V..V+2 segment, rest zero)
    # + doubled positional encoding (Bert.forward + encoder each add PE once).
    tbl = np.zeros((TBL_ROWS, D), np.float32)
    tbl[0:V] = np.asarray(p['tok'])
    tbl[V:V + 3] = np.asarray(p['seg'])
    tbl[VS_PAD:VS_PAD + SEQ] = 2.0 * positional_encoding(SEQ, D)

    # weight slab: per-layer (128, 128) blocks + merged MLM/NSP head block.
    wslab = np.zeros((L + 1, 128, 128), np.float32)
    for li in range(L):
        lp = p['layers'][li]
        wslab[li, 0:D, 0:3 * D] = np.asarray(lp['wqkv'])
        wslab[li, 0:D, 3 * D:4 * D] = np.asarray(lp['wo'])
        wslab[li, D:2 * D, 0:Hd] = np.asarray(lp['w1'])
        wslab[li, 2 * D:2 * D + Hd, 0:D] = np.asarray(lp['w2'])
    wslab[L, 0:D, 0:V] = np.asarray(p['mlm_w'])           # MLM columns
    wslab[L, 0:D, V:V + 2] = np.asarray(p['nsp_w'])       # NSP columns
    wslab[L, D, 0:V] = np.asarray(p['mlm_b'])[0]
    wslab[L, D, V:V + 2] = np.asarray(p['nsp_b'])[0]

    # small-vector slab: one 128-lane row per bias / LayerNorm vector.
    vslab = np.zeros((L * VEC_ROWS_PER_LAYER, 128), np.float32)
    for li in range(L):
        lp = p['layers'][li]
        r = li * VEC_ROWS_PER_LAYER
        vslab[r + 0, 0:3 * D] = np.asarray(lp['bqkv'])[0]
        vslab[r + 1, 0:Hd] = np.asarray(lp['b1'])[0]
        vslab[r + 2, 0:D] = np.asarray(lp['bo'])[0]
        vslab[r + 3, 0:D] = np.asarray(lp['b2'])[0]
        vslab[r + 4, 0:D] = 1.0     # LayerNorm-1 gamma
        vslab[r + 5, 0:D] = 0.0     # LayerNorm-1 beta
        vslab[r + 6, 0:D] = 1.0     # LayerNorm-2 gamma
        vslab[r + 7, 0:D] = 0.0     # LayerNorm-2 beta

    return dict(tbl=jnp.asarray(tbl), wslab=jnp.asarray(wslab),
                vslab=jnp.asarray(vslab))


# ------------------------------ full forward -------------------------------
@jax.jit
def bert_language_model(packed, token_ids, segment_ids):
    B, S = token_ids.shape
    # Only trivial int32 layout glue remains in the wrapper; embedding lookup,
    # PE add, pad mask and both output heads all run inside the Pallas kernel.
    ids = jnp.concatenate(
        [token_ids.reshape(-1, 1), segment_ids.reshape(-1, 1)],
        axis=1).astype(jnp.int32)                          # (B*S, 2)
    out = fused_bert_forward(ids, token_ids.astype(jnp.int32), packed)
    mlm = out[:, :VOCAB_SIZE].reshape(B, S, VOCAB_SIZE)
    nsp = out.reshape(B, S, HEAD_COLS)[:, 0, VOCAB_SIZE:VOCAB_SIZE + 2]
    return mlm, nsp


# ---------------------------------- main -----------------------------------
if __name__ == "__main__":
    key = jax.random.PRNGKey(0)
    k_param, k_tok, k_seg = jax.random.split(key, 3)

    params = init_params(k_param)
    packed = pack_params(params)     # one-time packing, outside the hot path

    token_ids = jax.random.randint(k_tok, (BATCH, SEQ), 1, VOCAB_SIZE,
                                   dtype=jnp.int32)
    token_ids = token_ids.at[:, -1].set(0)      # ensure some padding tokens
    segment_ids = jax.random.randint(k_seg, (BATCH, SEQ), 1, 3, dtype=jnp.int32)
    segment_ids = segment_ids.at[:, -1].set(0)

    mlm_logits, nsp_logits = bert_language_model(packed, token_ids, segment_ids)
    jax.block_until_ready((mlm_logits, nsp_logits))

    assert mlm_logits.shape == (BATCH, SEQ, VOCAB_SIZE)
    assert nsp_logits.shape == (BATCH, 2)
    # TODO(synk): dropout layers are identity here (eval/deterministic semantics).
    print("KERNEL_OK")
</pallas_src>

<mosaic_0001>
module attributes {stable_mosaic.version = 11 : i64} {
  func.func @bert_forward_kernel(%arg0: memref<16x2xi32, #tpu.memory_space<vmem>>, %arg1: memref<2x8xi32, #tpu.memory_space<vmem>>, %arg2: memref<48x32xf32, #tpu.memory_space<vmem>>, %arg3: memref<3x128x128xf32, #tpu.memory_space<vmem>>, %arg4: memref<16x128xf32, #tpu.memory_space<vmem>>, %arg5: memref<16x128xf32, #tpu.memory_space<vmem>>) attributes {dimension_semantics = [], scalar_prefetch = 0 : i64, scratch_operands = 0 : i64, tpu.core_type = #tpu.core_type<tc>} {
    %c0 = arith.constant 0 : index
    %c0_0 = arith.constant 0 : index
    %0 = vector.load %arg0[%c0, %c0_0] : memref<16x2xi32, #tpu.memory_space<vmem>>, vector<16x2xi32>
    %1 = vector.extract_strided_slice %0 {offsets = [0, 0], sizes = [16, 1], strides = [1, 1]} : vector<16x2xi32> to vector<16x1xi32>
    %2 = vector.extract_strided_slice %0 {offsets = [0, 1], sizes = [16, 1], strides = [1, 1]} : vector<16x2xi32> to vector<16x1xi32>
    %c32_i32 = arith.constant 32 : i32
    %3 = vector.broadcast %c32_i32 : i32 to vector<16x1xi32>
    %4 = arith.addi %2, %3 : vector<16x1xi32>
    %5 = tpu.iota {dimensions = array<i32: 1>} : vector<16x40xi32>
    %6 = vector.broadcast %1 : vector<16x1xi32> to vector<16x40xi32>
    %7 = arith.cmpi eq, %5, %6 : vector<16x40xi32>
    %8 = vector.broadcast %4 : vector<16x1xi32> to vector<16x40xi32>
    %9 = arith.cmpi eq, %5, %8 : vector<16x40xi32>
    %10 = arith.ori %7, %9 : vector<16x40xi1>
    %cst = arith.constant 1.000000e+00 : f32
    %cst_1 = arith.constant 0.000000e+00 : f32
    %11 = vector.broadcast %cst : f32 to vector<16x40xf32>
    %12 = vector.broadcast %cst_1 : f32 to vector<16x40xf32>
    %13 = arith.select %10, %11, %12 : vector<16x40xi1>, vector<16x40xf32>
    %c0_2 = arith.constant 0 : index
    %c0_3 = arith.constant 0 : index
    %14 = vector.load %arg2[%c0_2, %c0_3] : memref<48x32xf32, #tpu.memory_space<vmem>>, vector<40x32xf32>
    %cst_4 = arith.constant dense<0.000000e+00> : vector<16x32xf32>
    %15 = tpu.matmul %13, %14, %cst_4 {dimension_numbers = #tpu.dot_dimension_numbers<[1], [0], [0], [1], [0, 0, 1, 1], [], []>} : vector<16x40xf32>, vector<40x32xf32>, vector<16x32xf32> -> vector<16x32xf32>
    %c40 = arith.constant 40 : index
    %c0_5 = arith.constant 0 : index
    %16 = vector.load %arg2[%c40, %c0_5] : memref<48x32xf32, #tpu.memory_space<vmem>>, vector<8x32xf32>
    %17 = vector.shape_cast %15 : vector<16x32xf32> to vector<2x8x32xf32>
    %18 = vector.shape_cast %16 : vector<8x32xf32> to vector<1x8x32xf32>
    %19 = vector.broadcast %18 : vector<1x8x32xf32> to vector<2x8x32xf32>
    %20 = arith.addf %17, %19 : vector<2x8x32xf32>
    %21 = vector.shape_cast %20 : vector<2x8x32xf32> to vector<16x32xf32>
    %c0_6 = arith.constant 0 : index
    %c0_7 = arith.constant 0 : index
    %22 = vector.load %arg1[%c0_6, %c0_7] : memref<2x8xi32, #tpu.memory_space<vmem>>, vector<2x8xi32>
    %c0_i32 = arith.constant 0 : i32
    %23 = vector.broadcast %c0_i32 : i32 to vector<2x8xi32>
    %24 = arith.cmpi eq, %22, %23 : vector<2x8xi32>
    %cst_8 = arith.constant -1.000000e+09 : f32
    %cst_9 = arith.constant 0.000000e+00 : f32
    %25 = vector.broadcast %cst_8 : f32 to vector<2x8xf32>
    %26 = vector.broadcast %cst_9 : f32 to vector<2x8xf32>
    %27 = arith.select %24, %25, %26 : vector<2x8xi1>, vector<2x8xf32>
    %28 = vector.shape_cast %27 : vector<2x8xf32> to vector<2x1x8xf32>
    %c0_10 = arith.constant 0 : index
    %c0_11 = arith.constant 0 : index
    %c0_12 = arith.constant 0 : index
    %29 = vector.load %arg3[%c0_10, %c0_11, %c0_12] : memref<3x128x128xf32, #tpu.memory_space<vmem>>, vector<1x32x96xf32>
    %30 = vector.shape_cast %29 : vector<1x32x96xf32> to vector<32x96xf32>
    %c0_13 = arith.constant 0 : index
    %c0_14 = arith.constant 0 : index
    %c96 = arith.constant 96 : index
    %31 = vector.load %arg3[%c0_13, %c0_14, %c96] : memref<3x128x128xf32, #tpu.memory_space<vmem>>, vector<1x32x32xf32>
    %32 = vector.shape_cast %31 : vector<1x32x32xf32> to vector<32x32xf32>
    %c0_15 = arith.constant 0 : index
    %c32 = arith.constant 32 : index
    %c0_16 = arith.constant 0 : index
    %33 = vector.load %arg3[%c0_15, %c32, %c0_16] : memref<3x128x128xf32, #tpu.memory_space<vmem>>, vector<1x32x64xf32>
    %34 = vector.shape_cast %33 : vector<1x32x64xf32> to vector<32x64xf32>
    %c0_17 = arith.constant 0 : index
    %c64 = arith.constant 64 : index
    %c0_18 = arith.constant 0 : index
    %35 = vector.load %arg3[%c0_17, %c64, %c0_18] : memref<3x128x128xf32, #tpu.memory_space<vmem>>, vector<1x64x32xf32>
    %36 = vector.shape_cast %35 : vector<1x64x32xf32> to vector<64x32xf32>
    %c0_19 = arith.constant 0 : index
    %c0_20 = arith.constant 0 : index
    %37 = vector.load %arg4[%c0_19, %c0_20] : memref<16x128xf32, #tpu.memory_space<vmem>>, vector<1x96xf32>
    %c1 = arith.constant 1 : index
    %c0_21 = arith.constant 0 : index
    %38 = vector.load %arg4[%c1, %c0_21] : memref<16x128xf32, #tpu.memory_space<vmem>>, vector<1x64xf32>
    %c2 = arith.constant 2 : index
    %c0_22 = arith.constant 0 : index
    %39 = vector.load %arg4[%c2, %c0_22] : memref<16x128xf32, #tpu.memory_space<vmem>>, vector<1x32xf32>
    %c3 = arith.constant 3 : index
    %c0_23 = arith.constant 0 : index
    %40 = vector.load %arg4[%c3, %c0_23] : memref<16x128xf32, #tpu.memory_space<vmem>>, vector<1x32xf32>
    %c4 = arith.constant 4 : index
    %c0_24 = arith.constant 0 : index
    %41 = vector.load %arg4[%c4, %c0_24] : memref<16x128xf32, #tpu.memory_space<vmem>>, vector<1x32xf32>
    %c5 = arith.constant 5 : index
    %c0_25 = arith.constant 0 : index
    %42 = vector.load %arg4[%c5, %c0_25] : memref<16x128xf32, #tpu.memory_space<vmem>>, vector<1x32xf32>
    %c6 = arith.constant 6 : index
    %c0_26 = arith.constant 0 : index
    %43 = vector.load %arg4[%c6, %c0_26] : memref<16x128xf32, #tpu.memory_space<vmem>>, vector<1x32xf32>
    %c7 = arith.constant 7 : index
    %c0_27 = arith.constant 0 : index
    %44 = vector.load %arg4[%c7, %c0_27] : memref<16x128xf32, #tpu.memory_space<vmem>>, vector<1x32xf32>
    %cst_28 = arith.constant dense<0.000000e+00> : vector<16x96xf32>
    %45 = tpu.matmul %21, %30, %cst_28 {dimension_numbers = #tpu.dot_dimension_numbers<[1], [0], [0], [1], [0, 0, 1, 1], [], []>} : vector<16x32xf32>, vector<32x96xf32>, vector<16x96xf32> -> vector<16x96xf32>
    %46 = vector.broadcast %37 : vector<1x96xf32> to vector<16x96xf32>
    %47 = arith.addf %45, %46 : vector<16x96xf32>
    %cst_29 = arith.constant 0.000000e+00 : f32
    %48 = vector.broadcast %cst_29 : f32 to vector<16x32xf32>
    %49 = vector.extract_strided_slice %47 {offsets = [0, 0], sizes = [16, 8], strides = [1, 1]} : vector<16x96xf32> to vector<16x8xf32>
    %50 = vector.shape_cast %49 : vector<16x8xf32> to vector<2x8x8xf32>
    %51 = vector.extract_strided_slice %47 {offsets = [0, 32], sizes = [16, 8], strides = [1, 1]} : vector<16x96xf32> to vector<16x8xf32>
    %52 = vector.shape_cast %51 : vector<16x8xf32> to vector<2x8x8xf32>
    %53 = vector.extract_strided_slice %47 {offsets = [0, 64], sizes = [16, 8], strides = [1, 1]} : vector<16x96xf32> to vector<16x8xf32>
    %54 = vector.shape_cast %53 : vector<16x8xf32> to vector<2x8x8xf32>
    "tpu.trace_start"() <{level = 10 : i32, message = "bqd,bkd->bqk"}> : () -> ()
    %cst_30 = arith.constant dense<0.000000e+00> : vector<2x8x8xf32>
    %55 = tpu.matmul %50, %52, %cst_30 {dimension_numbers = #tpu.dot_dimension_numbers<[2], [2], [1], [1], [0, 0, 0, 1, 1, 1], [0], [0]>} : vector<2x8x8xf32>, vector<2x8x8xf32>, vector<2x8x8xf32> -> vector<2x8x8xf32>
    "tpu.trace_stop"() : () -> ()
    %cst_31 = arith.constant 0.353553385 : f32
    %56 = vector.broadcast %cst_31 : f32 to vector<2x8x8xf32>
    %57 = arith.mulf %55, %56 : vector<2x8x8xf32>
    %58 = vector.broadcast %28 : vector<2x1x8xf32> to vector<2x8x8xf32>
    %59 = arith.addf %57, %58 : vector<2x8x8xf32>
    %cst_32 = arith.constant dense<0xFF800000> : vector<2x8xf32>
    %60 = vector.multi_reduction <maximumf>, %59, %cst_32 [2] : vector<2x8x8xf32> to vector<2x8xf32>
    %61 = vector.shape_cast %60 : vector<2x8xf32> to vector<2x8x1xf32>
    %62 = vector.broadcast %61 : vector<2x8x1xf32> to vector<2x8x8xf32>
    %63 = arith.subf %59, %62 : vector<2x8x8xf32>
    %64 = math.exp %63 : vector<2x8x8xf32>
    %cst_33 = arith.constant dense<0.000000e+00> : vector<2x8xf32>
    %65 = vector.multi_reduction <add>, %64, %cst_33 [2] : vector<2x8x8xf32> to vector<2x8xf32>
    %66 = vector.shape_cast %65 : vector<2x8xf32> to vector<2x8x1xf32>
    %67 = tpu.reciprocal %66 : vector<2x8x1xf32> -> vector<2x8x1xf32>
    %68 = vector.broadcast %67 : vector<2x8x1xf32> to vector<2x8x8xf32>
    %69 = arith.mulf %64, %68 : vector<2x8x8xf32>
    "tpu.trace_start"() <{level = 10 : i32, message = "bqk,bkd->bqd"}> : () -> ()
    %cst_34 = arith.constant dense<0.000000e+00> : vector<2x8x8xf32>
    %70 = tpu.matmul %69, %54, %cst_34 {dimension_numbers = #tpu.dot_dimension_numbers<[2], [1], [1], [2], [0, 0, 0, 1, 1, 2], [0], [0]>} : vector<2x8x8xf32>, vector<2x8x8xf32>, vector<2x8x8xf32> -> vector<2x8x8xf32>
    "tpu.trace_stop"() : () -> ()
    %71 = vector.shape_cast %70 : vector<2x8x8xf32> to vector<16x8xf32>
    %72 = vector.extract_strided_slice %32 {offsets = [0, 0], sizes = [8, 32], strides = [1, 1]} : vector<32x32xf32> to vector<8x32xf32>
    %cst_35 = arith.constant dense<0.000000e+00> : vector<16x32xf32>
    %73 = tpu.matmul %71, %72, %cst_35 {dimension_numbers = #tpu.dot_dimension_numbers<[1], [0], [0], [1], [0, 0, 1, 1], [], []>} : vector<16x8xf32>, vector<8x32xf32>, vector<16x32xf32> -> vector<16x32xf32>
    %74 = arith.addf %48, %73 : vector<16x32xf32>
    %75 = vector.extract_strided_slice %47 {offsets = [0, 8], sizes = [16, 8], strides = [1, 1]} : vector<16x96xf32> to vector<16x8xf32>
    %76 = vector.shape_cast %75 : vector<16x8xf32> to vector<2x8x8xf32>
    %77 = vector.extract_strided_slice %47 {offsets = [0, 40], sizes = [16, 8], strides = [1, 1]} : vector<16x96xf32> to vector<16x8xf32>
    %78 = vector.shape_cast %77 : vector<16x8xf32> to vector<2x8x8xf32>
    %79 = vector.extract_strided_slice %47 {offsets = [0, 72], sizes = [16, 8], strides = [1, 1]} : vector<16x96xf32> to vector<16x8xf32>
    %80 = vector.shape_cast %79 : vector<16x8xf32> to vector<2x8x8xf32>
    "tpu.trace_start"() <{level = 10 : i32, message = "bqd,bkd->bqk"}> : () -> ()
    %cst_36 = arith.constant dense<0.000000e+00> : vector<2x8x8xf32>
    %81 = tpu.matmul %76, %78, %cst_36 {dimension_numbers = #tpu.dot_dimension_numbers<[2], [2], [1], [1], [0, 0, 0, 1, 1, 1], [0], [0]>} : vector<2x8x8xf32>, vector<2x8x8xf32>, vector<2x8x8xf32> -> vector<2x8x8xf32>
    "tpu.trace_stop"() : () -> ()
    %cst_37 = arith.constant 0.353553385 : f32
    %82 = vector.broadcast %cst_37 : f32 to vector<2x8x8xf32>
    %83 = arith.mulf %81, %82 : vector<2x8x8xf32>
    %84 = vector.broadcast %28 : vector<2x1x8xf32> to vector<2x8x8xf32>
    %85 = arith.addf %83, %84 : vector<2x8x8xf32>
    %cst_38 = arith.constant dense<0xFF800000> : vector<2x8xf32>
    %86 = vector.multi_reduction <maximumf>, %85, %cst_38 [2] : vector<2x8x8xf32> to vector<2x8xf32>
    %87 = vector.shape_cast %86 : vector<2x8xf32> to vector<2x8x1xf32>
    %88 = vector.broadcast %87 : vector<2x8x1xf32> to vector<2x8x8xf32>
    %89 = arith.subf %85, %88 : vector<2x8x8xf32>
    %90 = math.exp %89 : vector<2x8x8xf32>
    %cst_39 = arith.constant dense<0.000000e+00> : vector<2x8xf32>
    %91 = vector.multi_reduction <add>, %90, %cst_39 [2] : vector<2x8x8xf32> to vector<2x8xf32>
    %92 = vector.shape_cast %91 : vector<2x8xf32> to vector<2x8x1xf32>
    %93 = tpu.reciprocal %92 : vector<2x8x1xf32> -> vector<2x8x1xf32>
    %94 = vector.broadcast %93 : vector<2x8x1xf32> to vector<2x8x8xf32>
    %95 = arith.mulf %90, %94 : vector<2x8x8xf32>
    "tpu.trace_start"() <{level = 10 : i32, message = "bqk,bkd->bqd"}> : () -> ()
    %cst_40 = arith.constant dense<0.000000e+00> : vector<2x8x8xf32>
    %96 = tpu.matmul %95, %80, %cst_40 {dimension_numbers = #tpu.dot_dimension_numbers<[2], [1], [1], [2], [0, 0, 0, 1, 1, 2], [0], [0]>} : vector<2x8x8xf32>, vector<2x8x8xf32>, vector<2x8x8xf32> -> vector<2x8x8xf32>
    "tpu.trace_stop"() : () -> ()
    %97 = vector.shape_cast %96 : vector<2x8x8xf32> to vector<16x8xf32>
    %98 = vector.extract_strided_slice %32 {offsets = [8, 0], sizes = [8, 32], strides = [1, 1]} : vector<32x32xf32> to vector<8x32xf32>
    %cst_41 = arith.constant dense<0.000000e+00> : vector<16x32xf32>
    %99 = tpu.matmul %97, %98, %cst_41 {dimension_numbers = #tpu.dot_dimension_numbers<[1], [0], [0], [1], [0, 0, 1, 1], [], []>} : vector<16x8xf32>, vector<8x32xf32>, vector<16x32xf32> -> vector<16x32xf32>
    %100 = arith.addf %74, %99 : vector<16x32xf32>
    %101 = vector.extract_strided_slice %47 {offsets = [0, 16], sizes = [16, 8], strides = [1, 1]} : vector<16x96xf32> to vector<16x8xf32>
    %102 = vector.shape_cast %101 : vector<16x8xf32> to vector<2x8x8xf32>
    %103 = vector.extract_strided_slice %47 {offsets = [0, 48], sizes = [16, 8], strides = [1, 1]} : vector<16x96xf32> to vector<16x8xf32>
    %104 = vector.shape_cast %103 : vector<16x8xf32> to vector<2x8x8xf32>
    %105 = vector.extract_strided_slice %47 {offsets = [0, 80], sizes = [16, 8], strides = [1, 1]} : vector<16x96xf32> to vector<16x8xf32>
    %106 = vector.shape_cast %105 : vector<16x8xf32> to vector<2x8x8xf32>
    "tpu.trace_start"() <{level = 10 : i32, message = "bqd,bkd->bqk"}> : () -> ()
    %cst_42 = arith.constant dense<0.000000e+00> : vector<2x8x8xf32>
    %107 = tpu.matmul %102, %104, %cst_42 {dimension_numbers = #tpu.dot_dimension_numbers<[2], [2], [1], [1], [0, 0, 0, 1, 1, 1], [0], [0]>} : vector<2x8x8xf32>, vector<2x8x8xf32>, vector<2x8x8xf32> -> vector<2x8x8xf32>
    "tpu.trace_stop"() : () -> ()
    %cst_43 = arith.constant 0.353553385 : f32
    %108 = vector.broadcast %cst_43 : f32 to vector<2x8x8xf32>
    %109 = arith.mulf %107, %108 : vector<2x8x8xf32>
    %110 = vector.broadcast %28 : vector<2x1x8xf32> to vector<2x8x8xf32>
    %111 = arith.addf %109, %110 : vector<2x8x8xf32>
    %cst_44 = arith.constant dense<0xFF800000> : vector<2x8xf32>
    %112 = vector.multi_reduction <maximumf>, %111, %cst_44 [2] : vector<2x8x8xf32> to vector<2x8xf32>
    %113 = vector.shape_cast %112 : vector<2x8xf32> to vector<2x8x1xf32>
    %114 = vector.broadcast %113 : vector<2x8x1xf32> to vector<2x8x8xf32>
    %115 = arith.subf %111, %114 : vector<2x8x8xf32>
    %116 = math.exp %115 : vector<2x8x8xf32>
    %cst_45 = arith.constant dense<0.000000e+00> : vector<2x8xf32>
    %117 = vector.multi_reduction <add>, %116, %cst_45 [2] : vector<2x8x8xf32> to vector<2x8xf32>
    %118 = vector.shape_cast %117 : vector<2x8xf32> to vector<2x8x1xf32>
    %119 = tpu.reciprocal %118 : vector<2x8x1xf32> -> vector<2x8x1xf32>
    %120 = vector.broadcast %119 : vector<2x8x1xf32> to vector<2x8x8xf32>
    %121 = arith.mulf %116, %120 : vector<2x8x8xf32>
    "tpu.trace_start"() <{level = 10 : i32, message = "bqk,bkd->bqd"}> : () -> ()
    %cst_46 = arith.constant dense<0.000000e+00> : vector<2x8x8xf32>
    %122 = tpu.matmul %121, %106, %cst_46 {dimension_numbers = #tpu.dot_dimension_numbers<[2], [1], [1], [2], [0, 0, 0, 1, 1, 2], [0], [0]>} : vector<2x8x8xf32>, vector<2x8x8xf32>, vector<2x8x8xf32> -> vector<2x8x8xf32>
    "tpu.trace_stop"() : () -> ()
    %123 = vector.shape_cast %122 : vector<2x8x8xf32> to vector<16x8xf32>
    %124 = vector.extract_strided_slice %32 {offsets = [16, 0], sizes = [8, 32], strides = [1, 1]} : vector<32x32xf32> to vector<8x32xf32>
    %cst_47 = arith.constant dense<0.000000e+00> : vector<16x32xf32>
    %125 = tpu.matmul %123, %124, %cst_47 {dimension_numbers = #tpu.dot_dimension_numbers<[1], [0], [0], [1], [0, 0, 1, 1], [], []>} : vector<16x8xf32>, vector<8x32xf32>, vector<16x32xf32> -> vector<16x32xf32>
    %126 = arith.addf %100, %125 : vector<16x32xf32>
    %127 = vector.extract_strided_slice %47 {offsets = [0, 24], sizes = [16, 8], strides = [1, 1]} : vector<16x96xf32> to vector<16x8xf32>
    %128 = vector.shape_cast %127 : vector<16x8xf32> to vector<2x8x8xf32>
    %129 = vector.extract_strided_slice %47 {offsets = [0, 56], sizes = [16, 8], strides = [1, 1]} : vector<16x96xf32> to vector<16x8xf32>
    %130 = vector.shape_cast %129 : vector<16x8xf32> to vector<2x8x8xf32>
    %131 = vector.extract_strided_slice %47 {offsets = [0, 88], sizes = [16, 8], strides = [1, 1]} : vector<16x96xf32> to vector<16x8xf32>
    %132 = vector.shape_cast %131 : vector<16x8xf32> to vector<2x8x8xf32>
    "tpu.trace_start"() <{level = 10 : i32, message = "bqd,bkd->bqk"}> : () -> ()
    %cst_48 = arith.constant dense<0.000000e+00> : vector<2x8x8xf32>
    %133 = tpu.matmul %128, %130, %cst_48 {dimension_numbers = #tpu.dot_dimension_numbers<[2], [2], [1], [1], [0, 0, 0, 1, 1, 1], [0], [0]>} : vector<2x8x8xf32>, vector<2x8x8xf32>, vector<2x8x8xf32> -> vector<2x8x8xf32>
    "tpu.trace_stop"() : () -> ()
    %cst_49 = arith.constant 0.353553385 : f32
    %134 = vector.broadcast %cst_49 : f32 to vector<2x8x8xf32>
    %135 = arith.mulf %133, %134 : vector<2x8x8xf32>
    %136 = vector.broadcast %28 : vector<2x1x8xf32> to vector<2x8x8xf32>
    %137 = arith.addf %135, %136 : vector<2x8x8xf32>
    %cst_50 = arith.constant dense<0xFF800000> : vector<2x8xf32>
    %138 = vector.multi_reduction <maximumf>, %137, %cst_50 [2] : vector<2x8x8xf32> to vector<2x8xf32>
    %139 = vector.shape_cast %138 : vector<2x8xf32> to vector<2x8x1xf32>
    %140 = vector.broadcast %139 : vector<2x8x1xf32> to vector<2x8x8xf32>
    %141 = arith.subf %137, %140 : vector<2x8x8xf32>
    %142 = math.exp %141 : vector<2x8x8xf32>
    %cst_51 = arith.constant dense<0.000000e+00> : vector<2x8xf32>
    %143 = vector.multi_reduction <add>, %142, %cst_51 [2] : vector<2x8x8xf32> to vector<2x8xf32>
    %144 = vector.shape_cast %143 : vector<2x8xf32> to vector<2x8x1xf32>
    %145 = tpu.reciprocal %144 : vector<2x8x1xf32> -> vector<2x8x1xf32>
    %146 = vector.broadcast %145 : vector<2x8x1xf32> to vector<2x8x8xf32>
    %147 = arith.mulf %142, %146 : vector<2x8x8xf32>
    "tpu.trace_start"() <{level = 10 : i32, message = "bqk,bkd->bqd"}> : () -> ()
    %cst_52 = arith.constant dense<0.000000e+00> : vector<2x8x8xf32>
    %148 = tpu.matmul %147, %132, %cst_52 {dimension_numbers = #tpu.dot_dimension_numbers<[2], [1], [1], [2], [0, 0, 0, 1, 1, 2], [0], [0]>} : vector<2x8x8xf32>, vector<2x8x8xf32>, vector<2x8x8xf32> -> vector<2x8x8xf32>
    "tpu.trace_stop"() : () -> ()
    %149 = vector.shape_cast %148 : vector<2x8x8xf32> to vector<16x8xf32>
    %150 = vector.extract_strided_slice %32 {offsets = [24, 0], sizes = [8, 32], strides = [1, 1]} : vector<32x32xf32> to vector<8x32xf32>
    %cst_53 = arith.constant dense<0.000000e+00> : vector<16x32xf32>
    %151 = tpu.matmul %149, %150, %cst_53 {dimension_numbers = #tpu.dot_dimension_numbers<[1], [0], [0], [1], [0, 0, 1, 1], [], []>} : vector<16x8xf32>, vector<8x32xf32>, vector<16x32xf32> -> vector<16x32xf32>
    %152 = arith.addf %126, %151 : vector<16x32xf32>
    %153 = vector.broadcast %39 : vector<1x32xf32> to vector<16x32xf32>
    %154 = arith.addf %152, %153 : vector<16x32xf32>
    %155 = arith.addf %21, %154 : vector<16x32xf32>
    %cst_54 = arith.constant dense<0.000000e+00> : vector<16xf32>
    %156 = vector.multi_reduction <add>, %155, %cst_54 [1] : vector<16x32xf32> to vector<16xf32>
    %157 = vector.shape_cast %156 : vector<16xf32> to vector<16x1xf32>
    %cst_55 = arith.constant 3.200000e+01 : f32
    %158 = vector.broadcast %cst_55 : f32 to vector<16x1xf32>
    %159 = arith.divf %157, %158 : vector<16x1xf32>
    %160 = vector.broadcast %159 : vector<16x1xf32> to vector<16x32xf32>
    %161 = arith.subf %155, %160 : vector<16x32xf32>
    %162 = arith.mulf %161, %161 : vector<16x32xf32>
    %cst_56 = arith.constant dense<0.000000e+00> : vector<16xf32>
    %163 = vector.multi_reduction <add>, %162, %cst_56 [1] : vector<16x32xf32> to vector<16xf32>
    %164 = vector.shape_cast %163 : vector<16xf32> to vector<16x1xf32>
    %cst_57 = arith.constant 3.200000e+01 : f32
    %165 = vector.broadcast %cst_57 : f32 to vector<16x1xf32>
    %166 = arith.divf %164, %165 : vector<16x1xf32>
    %167 = vector.broadcast %159 : vector<16x1xf32> to vector<16x32xf32>
    %168 = arith.subf %155, %167 : vector<16x32xf32>
    %cst_58 = arith.constant 9.99999974E-6 : f32
    %169 = vector.broadcast %cst_58 : f32 to vector<16x1xf32>
    %170 = arith.addf %166, %169 : vector<16x1xf32>
    %171 = math.rsqrt %170 : vector<16x1xf32>
    %172 = vector.broadcast %171 : vector<16x1xf32> to vector<16x32xf32>
    %173 = arith.mulf %168, %172 : vector<16x32xf32>
    %174 = vector.broadcast %41 : vector<1x32xf32> to vector<16x32xf32>
    %175 = arith.mulf %173, %174 : vector<16x32xf32>
    %176 = vector.broadcast %42 : vector<1x32xf32> to vector<16x32xf32>
    %177 = arith.addf %175, %176 : vector<16x32xf32>
    %cst_59 = arith.constant dense<0.000000e+00> : vector<16x64xf32>
    %178 = tpu.matmul %177, %34, %cst_59 {dimension_numbers = #tpu.dot_dimension_numbers<[1], [0], [0], [1], [0, 0, 1, 1], [], []>} : vector<16x32xf32>, vector<32x64xf32>, vector<16x64xf32> -> vector<16x64xf32>
    %179 = vector.broadcast %38 : vector<1x64xf32> to vector<16x64xf32>
    %180 = arith.addf %178, %179 : vector<16x64xf32>
    %cst_60 = arith.constant 0.000000e+00 : f32
    %181 = vector.broadcast %cst_60 : f32 to vector<16x64xf32>
    %182 = arith.maximumf %180, %181 : vector<16x64xf32>
    %cst_61 = arith.constant dense<0.000000e+00> : vector<16x32xf32>
    %183 = tpu.matmul %182, %36, %cst_61 {dimension_numbers = #tpu.dot_dimension_numbers<[1], [0], [0], [1], [0, 0, 1, 1], [], []>} : vector<16x64xf32>, vector<64x32xf32>, vector<16x32xf32> -> vector<16x32xf32>
    %184 = vector.broadcast %40 : vector<1x32xf32> to vector<16x32xf32>
    %185 = arith.addf %183, %184 : vector<16x32xf32>
    %186 = arith.addf %177, %185 : vector<16x32xf32>
    %cst_62 = arith.constant dense<0.000000e+00> : vector<16xf32>
    %187 = vector.multi_reduction <add>, %186, %cst_62 [1] : vector<16x32xf32> to vector<16xf32>
    %188 = vector.shape_cast %187 : vector<16xf32> to vector<16x1xf32>
    %cst_63 = arith.constant 3.200000e+01 : f32
    %189 = vector.broadcast %cst_63 : f32 to vector<16x1xf32>
    %190 = arith.divf %188, %189 : vector<16x1xf32>
    %191 = vector.broadcast %190 : vector<16x1xf32> to vector<16x32xf32>
    %192 = arith.subf %186, %191 : vector<16x32xf32>
    %193 = arith.mulf %192, %192 : vector<16x32xf32>
    %cst_64 = arith.constant dense<0.000000e+00> : vector<16xf32>
    %194 = vector.multi_reduction <add>, %193, %cst_64 [1] : vector<16x32xf32> to vector<16xf32>
    %195 = vector.shape_cast %194 : vector<16xf32> to vector<16x1xf32>
    %cst_65 = arith.constant 3.200000e+01 : f32
    %196 = vector.broadcast %cst_65 : f32 to vector<16x1xf32>
    %197 = arith.divf %195, %196 : vector<16x1xf32>
    %198 = vector.broadcast %190 : vector<16x1xf32> to vector<16x32xf32>
    %199 = arith.subf %186, %198 : vector<16x32xf32>
    %cst_66 = arith.constant 9.99999974E-6 : f32
    %200 = vector.broadcast %cst_66 : f32 to vector<16x1xf32>
    %201 = arith.addf %197, %200 : vector<16x1xf32>
    %202 = math.rsqrt %201 : vector<16x1xf32>
    %203 = vector.broadcast %202 : vector<16x1xf32> to vector<16x32xf32>
    %204 = arith.mulf %199, %203 : vector<16x32xf32>
    %205 = vector.broadcast %43 : vector<1x32xf32> to vector<16x32xf32>
    %206 = arith.mulf %204, %205 : vector<16x32xf32>
    %207 = vector.broadcast %44 : vector<1x32xf32> to vector<16x32xf32>
    %208 = arith.addf %206, %207 : vector<16x32xf32>
    %c1_67 = arith.constant 1 : index
    %c0_68 = arith.constant 0 : index
    %c0_69 = arith.constant 0 : index
    %209 = vector.load %arg3[%c1_67, %c0_68, %c0_69] : memref<3x128x128xf32, #tpu.memory_space<vmem>>, vector<1x32x96xf32>
    %210 = vector.shape_cast %209 : vector<1x32x96xf32> to vector<32x96xf32>
    %c1_70 = arith.constant 1 : index
    %c0_71 = arith.constant 0 : index
    %c96_72 = arith.constant 96 : index
    %211 = vector.load %arg3[%c1_70, %c0_71, %c96_72] : memref<3x128x128xf32, #tpu.memory_space<vmem>>, vector<1x32x32xf32>
    %212 = vector.shape_cast %211 : vector<1x32x32xf32> to vector<32x32xf32>
    %c1_73 = arith.constant 1 : index
    %c32_74 = arith.constant 32 : index
    %c0_75 = arith.constant 0 : index
    %213 = vector.load %arg3[%c1_73, %c32_74, %c0_75] : memref<3x128x128xf32, #tpu.memory_space<vmem>>, vector<1x32x64xf32>
    %214 = vector.shape_cast %213 : vector<1x32x64xf32> to vector<32x64xf32>
    %c1_76 = arith.constant 1 : index
    %c64_77 = arith.constant 64 : index
    %c0_78 = arith.constant 0 : index
    %215 = vector.load %arg3[%c1_76, %c64_77, %c0_78] : memref<3x128x128xf32, #tpu.memory_space<vmem>>, vector<1x64x32xf32>
    %216 = vector.shape_cast %215 : vector<1x64x32xf32> to vector<64x32xf32>
    %c8 = arith.constant 8 : index
    %c0_79 = arith.constant 0 : index
    %217 = vector.load %arg4[%c8, %c0_79] : memref<16x128xf32, #tpu.memory_space<vmem>>, vector<1x96xf32>
    %c9 = arith.constant 9 : index
    %c0_80 = arith.constant 0 : index
    %218 = vector.load %arg4[%c9, %c0_80] : memref<16x128xf32, #tpu.memory_space<vmem>>, vector<1x64xf32>
    %c10 = arith.constant 10 : index
    %c0_81 = arith.constant 0 : index
    %219 = vector.load %arg4[%c10, %c0_81] : memref<16x128xf32, #tpu.memory_space<vmem>>, vector<1x32xf32>
    %c11 = arith.constant 11 : index
    %c0_82 = arith.constant 0 : index
    %220 = vector.load %arg4[%c11, %c0_82] : memref<16x128xf32, #tpu.memory_space<vmem>>, vector<1x32xf32>
    %c12 = arith.constant 12 : index
    %c0_83 = arith.constant 0 : index
    %221 = vector.load %arg4[%c12, %c0_83] : memref<16x128xf32, #tpu.memory_space<vmem>>, vector<1x32xf32>
    %c13 = arith.constant 13 : index
    %c0_84 = arith.constant 0 : index
    %222 = vector.load %arg4[%c13, %c0_84] : memref<16x128xf32, #tpu.memory_space<vmem>>, vector<1x32xf32>
    %c14 = arith.constant 14 : index
    %c0_85 = arith.constant 0 : index
    %223 = vector.load %arg4[%c14, %c0_85] : memref<16x128xf32, #tpu.memory_space<vmem>>, vector<1x32xf32>
    %c15 = arith.constant 15 : index
    %c0_86 = arith.constant 0 : index
    %224 = vector.load %arg4[%c15, %c0_86] : memref<16x128xf32, #tpu.memory_space<vmem>>, vector<1x32xf32>
    %cst_87 = arith.constant dense<0.000000e+00> : vector<16x96xf32>
    %225 = tpu.matmul %208, %210, %cst_87 {dimension_numbers = #tpu.dot_dimension_numbers<[1], [0], [0], [1], [0, 0, 1, 1], [], []>} : vector<16x32xf32>, vector<32x96xf32>, vector<16x96xf32> -> vector<16x96xf32>
    %226 = vector.broadcast %217 : vector<1x96xf32> to vector<16x96xf32>
    %227 = arith.addf %225, %226 : vector<16x96xf32>
    %cst_88 = arith.constant 0.000000e+00 : f32
    %228 = vector.broadcast %cst_88 : f32 to vector<16x32xf32>
    %229 = vector.extract_strided_slice %227 {offsets = [0, 0], sizes = [16, 8], strides = [1, 1]} : vector<16x96xf32> to vector<16x8xf32>
    %230 = vector.shape_cast %229 : vector<16x8xf32> to vector<2x8x8xf32>
    %231 = vector.extract_strided_slice %227 {offsets = [0, 32], sizes = [16, 8], strides = [1, 1]} : vector<16x96xf32> to vector<16x8xf32>
    %232 = vector.shape_cast %231 : vector<16x8xf32> to vector<2x8x8xf32>
    %233 = vector.extract_strided_slice %227 {offsets = [0, 64], sizes = [16, 8], strides = [1, 1]} : vector<16x96xf32> to vector<16x8xf32>
    %234 = vector.shape_cast %233 : vector<16x8xf32> to vector<2x8x8xf32>
    "tpu.trace_start"() <{level = 10 : i32, message = "bqd,bkd->bqk"}> : () -> ()
    %cst_89 = arith.constant dense<0.000000e+00> : vector<2x8x8xf32>
    %235 = tpu.matmul %230, %232, %cst_89 {dimension_numbers = #tpu.dot_dimension_numbers<[2], [2], [1], [1], [0, 0, 0, 1, 1, 1], [0], [0]>} : vector<2x8x8xf32>, vector<2x8x8xf32>, vector<2x8x8xf32> -> vector<2x8x8xf32>
    "tpu.trace_stop"() : () -> ()
    %cst_90 = arith.constant 0.353553385 : f32
    %236 = vector.broadcast %cst_90 : f32 to vector<2x8x8xf32>
    %237 = arith.mulf %235, %236 : vector<2x8x8xf32>
    %238 = vector.broadcast %28 : vector<2x1x8xf32> to vector<2x8x8xf32>
    %239 = arith.addf %237, %238 : vector<2x8x8xf32>
    %cst_91 = arith.constant dense<0xFF800000> : vector<2x8xf32>
    %240 = vector.multi_reduction <maximumf>, %239, %cst_91 [2] : vector<2x8x8xf32> to vector<2x8xf32>
    %241 = vector.shape_cast %240 : vector<2x8xf32> to vector<2x8x1xf32>
    %242 = vector.broadcast %241 : vector<2x8x1xf32> to vector<2x8x8xf32>
    %243 = arith.subf %239, %242 : vector<2x8x8xf32>
    %244 = math.exp %243 : vector<2x8x8xf32>
    %cst_92 = arith.constant dense<0.000000e+00> : vector<2x8xf32>
    %245 = vector.multi_reduction <add>, %244, %cst_92 [2] : vector<2x8x8xf32> to vector<2x8xf32>
    %246 = vector.shape_cast %245 : vector<2x8xf32> to vector<2x8x1xf32>
    %247 = tpu.reciprocal %246 : vector<2x8x1xf32> -> vector<2x8x1xf32>
    %248 = vector.broadcast %247 : vector<2x8x1xf32> to vector<2x8x8xf32>
    %249 = arith.mulf %244, %248 : vector<2x8x8xf32>
    "tpu.trace_start"() <{level = 10 : i32, message = "bqk,bkd->bqd"}> : () -> ()
    %cst_93 = arith.constant dense<0.000000e+00> : vector<2x8x8xf32>
    %250 = tpu.matmul %249, %234, %cst_93 {dimension_numbers = #tpu.dot_dimension_numbers<[2], [1], [1], [2], [0, 0, 0, 1, 1, 2], [0], [0]>} : vector<2x8x8xf32>, vector<2x8x8xf32>, vector<2x8x8xf32> -> vector<2x8x8xf32>
    "tpu.trace_stop"() : () -> ()
    %251 = vector.shape_cast %250 : vector<2x8x8xf32> to vector<16x8xf32>
    %252 = vector.extract_strided_slice %212 {offsets = [0, 0], sizes = [8, 32], strides = [1, 1]} : vector<32x32xf32> to vector<8x32xf32>
    %cst_94 = arith.constant dense<0.000000e+00> : vector<16x32xf32>
    %253 = tpu.matmul %251, %252, %cst_94 {dimension_numbers = #tpu.dot_dimension_numbers<[1], [0], [0], [1], [0, 0, 1, 1], [], []>} : vector<16x8xf32>, vector<8x32xf32>, vector<16x32xf32> -> vector<16x32xf32>
    %254 = arith.addf %228, %253 : vector<16x32xf32>
    %255 = vector.extract_strided_slice %227 {offsets = [0, 8], sizes = [16, 8], strides = [1, 1]} : vector<16x96xf32> to vector<16x8xf32>
    %256 = vector.shape_cast %255 : vector<16x8xf32> to vector<2x8x8xf32>
    %257 = vector.extract_strided_slice %227 {offsets = [0, 40], sizes = [16, 8], strides = [1, 1]} : vector<16x96xf32> to vector<16x8xf32>
    %258 = vector.shape_cast %257 : vector<16x8xf32> to vector<2x8x8xf32>
    %259 = vector.extract_strided_slice %227 {offsets = [0, 72], sizes = [16, 8], strides = [1, 1]} : vector<16x96xf32> to vector<16x8xf32>
    %260 = vector.shape_cast %259 : vector<16x8xf32> to vector<2x8x8xf32>
    "tpu.trace_start"() <{level = 10 : i32, message = "bqd,bkd->bqk"}> : () -> ()
    %cst_95 = arith.constant dense<0.000000e+00> : vector<2x8x8xf32>
    %261 = tpu.matmul %256, %258, %cst_95 {dimension_numbers = #tpu.dot_dimension_numbers<[2], [2], [1], [1], [0, 0, 0, 1, 1, 1], [0], [0]>} : vector<2x8x8xf32>, vector<2x8x8xf32>, vector<2x8x8xf32> -> vector<2x8x8xf32>
    "tpu.trace_stop"() : () -> ()
    %cst_96 = arith.constant 0.353553385 : f32
    %262 = vector.broadcast %cst_96 : f32 to vector<2x8x8xf32>
    %263 = arith.mulf %261, %262 : vector<2x8x8xf32>
    %264 = vector.broadcast %28 : vector<2x1x8xf32> to vector<2x8x8xf32>
    %265 = arith.addf %263, %264 : vector<2x8x8xf32>
    %cst_97 = arith.constant dense<0xFF800000> : vector<2x8xf32>
    %266 = vector.multi_reduction <maximumf>, %265, %cst_97 [2] : vector<2x8x8xf32> to vector<2x8xf32>
    %267 = vector.shape_cast %266 : vector<2x8xf32> to vector<2x8x1xf32>
    %268 = vector.broadcast %267 : vector<2x8x1xf32> to vector<2x8x8xf32>
    %269 = arith.subf %265, %268 : vector<2x8x8xf32>
    %270 = math.exp %269 : vector<2x8x8xf32>
    %cst_98 = arith.constant dense<0.000000e+00> : vector<2x8xf32>
    %271 = vector.multi_reduction <add>, %270, %cst_98 [2] : vector<2x8x8xf32> to vector<2x8xf32>
    %272 = vector.shape_cast %271 : vector<2x8xf32> to vector<2x8x1xf32>
    %273 = tpu.reciprocal %272 : vector<2x8x1xf32> -> vector<2x8x1xf32>
    %274 = vector.broadcast %273 : vector<2x8x1xf32> to vector<2x8x8xf32>
    %275 = arith.mulf %270, %274 : vector<2x8x8xf32>
    "tpu.trace_start"() <{level = 10 : i32, message = "bqk,bkd->bqd"}> : () -> ()
    %cst_99 = arith.constant dense<0.000000e+00> : vector<2x8x8xf32>
    %276 = tpu.matmul %275, %260, %cst_99 {dimension_numbers = #tpu.dot_dimension_numbers<[2], [1], [1], [2], [0, 0, 0, 1, 1, 2], [0], [0]>} : vector<2x8x8xf32>, vector<2x8x8xf32>, vector<2x8x8xf32> -> vector<2x8x8xf32>
    "tpu.trace_stop"() : () -> ()
    %277 = vector.shape_cast %276 : vector<2x8x8xf32> to vector<16x8xf32>
    %278 = vector.extract_strided_slice %212 {offsets = [8, 0], sizes = [8, 32], strides = [1, 1]} : vector<32x32xf32> to vector<8x32xf32>
    %cst_100 = arith.constant dense<0.000000e+00> : vector<16x32xf32>
    %279 = tpu.matmul %277, %278, %cst_100 {dimension_numbers = #tpu.dot_dimension_numbers<[1], [0], [0], [1], [0, 0, 1, 1], [], []>} : vector<16x8xf32>, vector<8x32xf32>, vector<16x32xf32> -> vector<16x32xf32>
    %280 = arith.addf %254, %279 : vector<16x32xf32>
    %281 = vector.extract_strided_slice %227 {offsets = [0, 16], sizes = [16, 8], strides = [1, 1]} : vector<16x96xf32> to vector<16x8xf32>
    %282 = vector.shape_cast %281 : vector<16x8xf32> to vector<2x8x8xf32>
    %283 = vector.extract_strided_slice %227 {offsets = [0, 48], sizes = [16, 8], strides = [1, 1]} : vector<16x96xf32> to vector<16x8xf32>
    %284 = vector.shape_cast %283 : vector<16x8xf32> to vector<2x8x8xf32>
    %285 = vector.extract_strided_slice %227 {offsets = [0, 80], sizes = [16, 8], strides = [1, 1]} : vector<16x96xf32> to vector<16x8xf32>
    %286 = vector.shape_cast %285 : vector<16x8xf32> to vector<2x8x8xf32>
    "tpu.trace_start"() <{level = 10 : i32, message = "bqd,bkd->bqk"}> : () -> ()
    %cst_101 = arith.constant dense<0.000000e+00> : vector<2x8x8xf32>
    %287 = tpu.matmul %282, %284, %cst_101 {dimension_numbers = #tpu.dot_dimension_numbers<[2], [2], [1], [1], [0, 0, 0, 1, 1, 1], [0], [0]>} : vector<2x8x8xf32>, vector<2x8x8xf32>, vector<2x8x8xf32> -> vector<2x8x8xf32>
    "tpu.trace_stop"() : () -> ()
    %cst_102 = arith.constant 0.353553385 : f32
    %288 = vector.broadcast %cst_102 : f32 to vector<2x8x8xf32>
    %289 = arith.mulf %287, %288 : vector<2x8x8xf32>
    %290 = vector.broadcast %28 : vector<2x1x8xf32> to vector<2x8x8xf32>
    %291 = arith.addf %289, %290 : vector<2x8x8xf32>
    %cst_103 = arith.constant dense<0xFF800000> : vector<2x8xf32>
    %292 = vector.multi_reduction <maximumf>, %291, %cst_103 [2] : vector<2x8x8xf32> to vector<2x8xf32>
    %293 = vector.shape_cast %292 : vector<2x8xf32> to vector<2x8x1xf32>
    %294 = vector.broadcast %293 : vector<2x8x1xf32> to vector<2x8x8xf32>
    %295 = arith.subf %291, %294 : vector<2x8x8xf32>
    %296 = math.exp %295 : vector<2x8x8xf32>
    %cst_104 = arith.constant dense<0.000000e+00> : vector<2x8xf32>
    %297 = vector.multi_reduction <add>, %296, %cst_104 [2] : vector<2x8x8xf32> to vector<2x8xf32>
    %298 = vector.shape_cast %297 : vector<2x8xf32> to vector<2x8x1xf32>
    %299 = tpu.reciprocal %298 : vector<2x8x1xf32> -> vector<2x8x1xf32>
    %300 = vector.broadcast %299 : vector<2x8x1xf32> to vector<2x8x8xf32>
    %301 = arith.mulf %296, %300 : vector<2x8x8xf32>
    "tpu.trace_start"() <{level = 10 : i32, message = "bqk,bkd->bqd"}> : () -> ()
    %cst_105 = arith.constant dense<0.000000e+00> : vector<2x8x8xf32>
    %302 = tpu.matmul %301, %286, %cst_105 {dimension_numbers = #tpu.dot_dimension_numbers<[2], [1], [1], [2], [0, 0, 0, 1, 1, 2], [0], [0]>} : vector<2x8x8xf32>, vector<2x8x8xf32>, vector<2x8x8xf32> -> vector<2x8x8xf32>
    "tpu.trace_stop"() : () -> ()
    %303 = vector.shape_cast %302 : vector<2x8x8xf32> to vector<16x8xf32>
    %304 = vector.extract_strided_slice %212 {offsets = [16, 0], sizes = [8, 32], strides = [1, 1]} : vector<32x32xf32> to vector<8x32xf32>
    %cst_106 = arith.constant dense<0.000000e+00> : vector<16x32xf32>
    %305 = tpu.matmul %303, %304, %cst_106 {dimension_numbers = #tpu.dot_dimension_numbers<[1], [0], [0], [1], [0, 0, 1, 1], [], []>} : vector<16x8xf32>, vector<8x32xf32>, vector<16x32xf32> -> vector<16x32xf32>
    %306 = arith.addf %280, %305 : vector<16x32xf32>
    %307 = vector.extract_strided_slice %227 {offsets = [0, 24], sizes = [16, 8], strides = [1, 1]} : vector<16x96xf32> to vector<16x8xf32>
    %308 = vector.shape_cast %307 : vector<16x8xf32> to vector<2x8x8xf32>
    %309 = vector.extract_strided_slice %227 {offsets = [0, 56], sizes = [16, 8], strides = [1, 1]} : vector<16x96xf32> to vector<16x8xf32>
    %310 = vector.shape_cast %309 : vector<16x8xf32> to vector<2x8x8xf32>
    %311 = vector.extract_strided_slice %227 {offsets = [0, 88], sizes = [16, 8], strides = [1, 1]} : vector<16x96xf32> to vector<16x8xf32>
    %312 = vector.shape_cast %311 : vector<16x8xf32> to vector<2x8x8xf32>
    "tpu.trace_start"() <{level = 10 : i32, message = "bqd,bkd->bqk"}> : () -> ()
    %cst_107 = arith.constant dense<0.000000e+00> : vector<2x8x8xf32>
    %313 = tpu.matmul %308, %310, %cst_107 {dimension_numbers = #tpu.dot_dimension_numbers<[2], [2], [1], [1], [0, 0, 0, 1, 1, 1], [0], [0]>} : vector<2x8x8xf32>, vector<2x8x8xf32>, vector<2x8x8xf32> -> vector<2x8x8xf32>
    "tpu.trace_stop"() : () -> ()
    %cst_108 = arith.constant 0.353553385 : f32
    %314 = vector.broadcast %cst_108 : f32 to vector<2x8x8xf32>
    %315 = arith.mulf %313, %314 : vector<2x8x8xf32>
    %316 = vector.broadcast %28 : vector<2x1x8xf32> to vector<2x8x8xf32>
    %317 = arith.addf %315, %316 : vector<2x8x8xf32>
    %cst_109 = arith.constant dense<0xFF800000> : vector<2x8xf32>
    %318 = vector.multi_reduction <maximumf>, %317, %cst_109 [2] : vector<2x8x8xf32> to vector<2x8xf32>
    %319 = vector.shape_cast %318 : vector<2x8xf32> to vector<2x8x1xf32>
    %320 = vector.broadcast %319 : vector<2x8x1xf32> to vector<2x8x8xf32>
    %321 = arith.subf %317, %320 : vector<2x8x8xf32>
    %322 = math.exp %321 : vector<2x8x8xf32>
    %cst_110 = arith.constant dense<0.000000e+00> : vector<2x8xf32>
    %323 = vector.multi_reduction <add>, %322, %cst_110 [2] : vector<2x8x8xf32> to vector<2x8xf32>
    %324 = vector.shape_cast %323 : vector<2x8xf32> to vector<2x8x1xf32>
    %325 = tpu.reciprocal %324 : vector<2x8x1xf32> -> vector<2x8x1xf32>
    %326 = vector.broadcast %325 : vector<2x8x1xf32> to vector<2x8x8xf32>
    %327 = arith.mulf %322, %326 : vector<2x8x8xf32>
    "tpu.trace_start"() <{level = 10 : i32, message = "bqk,bkd->bqd"}> : () -> ()
    %cst_111 = arith.constant dense<0.000000e+00> : vector<2x8x8xf32>
    %328 = tpu.matmul %327, %312, %cst_111 {dimension_numbers = #tpu.dot_dimension_numbers<[2], [1], [1], [2], [0, 0, 0, 1, 1, 2], [0], [0]>} : vector<2x8x8xf32>, vector<2x8x8xf32>, vector<2x8x8xf32> -> vector<2x8x8xf32>
    "tpu.trace_stop"() : () -> ()
    %329 = vector.shape_cast %328 : vector<2x8x8xf32> to vector<16x8xf32>
    %330 = vector.extract_strided_slice %212 {offsets = [24, 0], sizes = [8, 32], strides = [1, 1]} : vector<32x32xf32> to vector<8x32xf32>
    %cst_112 = arith.constant dense<0.000000e+00> : vector<16x32xf32>
    %331 = tpu.matmul %329, %330, %cst_112 {dimension_numbers = #tpu.dot_dimension_numbers<[1], [0], [0], [1], [0, 0, 1, 1], [], []>} : vector<16x8xf32>, vector<8x32xf32>, vector<16x32xf32> -> vector<16x32xf32>
    %332 = arith.addf %306, %331 : vector<16x32xf32>
    %333 = vector.broadcast %219 : vector<1x32xf32> to vector<16x32xf32>
    %334 = arith.addf %332, %333 : vector<16x32xf32>
    %335 = arith.addf %208, %334 : vector<16x32xf32>
    %cst_113 = arith.constant dense<0.000000e+00> : vector<16xf32>
    %336 = vector.multi_reduction <add>, %335, %cst_113 [1] : vector<16x32xf32> to vector<16xf32>
    %337 = vector.shape_cast %336 : vector<16xf32> to vector<16x1xf32>
    %cst_114 = arith.constant 3.200000e+01 : f32
    %338 = vector.broadcast %cst_114 : f32 to vector<16x1xf32>
    %339 = arith.divf %337, %338 : vector<16x1xf32>
    %340 = vector.broadcast %339 : vector<16x1xf32> to vector<16x32xf32>
    %341 = arith.subf %335, %340 : vector<16x32xf32>
    %342 = arith.mulf %341, %341 : vector<16x32xf32>
    %cst_115 = arith.constant dense<0.000000e+00> : vector<16xf32>
    %343 = vector.multi_reduction <add>, %342, %cst_115 [1] : vector<16x32xf32> to vector<16xf32>
    %344 = vector.shape_cast %343 : vector<16xf32> to vector<16x1xf32>
    %cst_116 = arith.constant 3.200000e+01 : f32
    %345 = vector.broadcast %cst_116 : f32 to vector<16x1xf32>
    %346 = arith.divf %344, %345 : vector<16x1xf32>
    %347 = vector.broadcast %339 : vector<16x1xf32> to vector<16x32xf32>
    %348 = arith.subf %335, %347 : vector<16x32xf32>
    %cst_117 = arith.constant 9.99999974E-6 : f32
    %349 = vector.broadcast %cst_117 : f32 to vector<16x1xf32>
    %350 = arith.addf %346, %349 : vector<16x1xf32>
    %351 = math.rsqrt %350 : vector<16x1xf32>
    %352 = vector.broadcast %351 : vector<16x1xf32> to vector<16x32xf32>
    %353 = arith.mulf %348, %352 : vector<16x32xf32>
    %354 = vector.broadcast %221 : vector<1x32xf32> to vector<16x32xf32>
    %355 = arith.mulf %353, %354 : vector<16x32xf32>
    %356 = vector.broadcast %222 : vector<1x32xf32> to vector<16x32xf32>
    %357 = arith.addf %355, %356 : vector<16x32xf32>
    %cst_118 = arith.constant dense<0.000000e+00> : vector<16x64xf32>
    %358 = tpu.matmul %357, %214, %cst_118 {dimension_numbers = #tpu.dot_dimension_numbers<[1], [0], [0], [1], [0, 0, 1, 1], [], []>} : vector<16x32xf32>, vector<32x64xf32>, vector<16x64xf32> -> vector<16x64xf32>
    %359 = vector.broadcast %218 : vector<1x64xf32> to vector<16x64xf32>
    %360 = arith.addf %358, %359 : vector<16x64xf32>
    %cst_119 = arith.constant 0.000000e+00 : f32
    %361 = vector.broadcast %cst_119 : f32 to vector<16x64xf32>
    %362 = arith.maximumf %360, %361 : vector<16x64xf32>
    %cst_120 = arith.constant dense<0.000000e+00> : vector<16x32xf32>
    %363 = tpu.matmul %362, %216, %cst_120 {dimension_numbers = #tpu.dot_dimension_numbers<[1], [0], [0], [1], [0, 0, 1, 1], [], []>} : vector<16x64xf32>, vector<64x32xf32>, vector<16x32xf32> -> vector<16x32xf32>
    %364 = vector.broadcast %220 : vector<1x32xf32> to vector<16x32xf32>
    %365 = arith.addf %363, %364 : vector<16x32xf32>
    %366 = arith.addf %357, %365 : vector<16x32xf32>
    %cst_121 = arith.constant dense<0.000000e+00> : vector<16xf32>
    %367 = vector.multi_reduction <add>, %366, %cst_121 [1] : vector<16x32xf32> to vector<16xf32>
    %368 = vector.shape_cast %367 : vector<16xf32> to vector<16x1xf32>
    %cst_122 = arith.constant 3.200000e+01 : f32
    %369 = vector.broadcast %cst_122 : f32 to vector<16x1xf32>
    %370 = arith.divf %368, %369 : vector<16x1xf32>
    %371 = vector.broadcast %370 : vector<16x1xf32> to vector<16x32xf32>
    %372 = arith.subf %366, %371 : vector<16x32xf32>
    %373 = arith.mulf %372, %372 : vector<16x32xf32>
    %cst_123 = arith.constant dense<0.000000e+00> : vector<16xf32>
    %374 = vector.multi_reduction <add>, %373, %cst_123 [1] : vector<16x32xf32> to vector<16xf32>
    %375 = vector.shape_cast %374 : vector<16xf32> to vector<16x1xf32>
    %cst_124 = arith.constant 3.200000e+01 : f32
    %376 = vector.broadcast %cst_124 : f32 to vector<16x1xf32>
    %377 = arith.divf %375, %376 : vector<16x1xf32>
    %378 = vector.broadcast %370 : vector<16x1xf32> to vector<16x32xf32>
    %379 = arith.subf %366, %378 : vector<16x32xf32>
    %cst_125 = arith.constant 9.99999974E-6 : f32
    %380 = vector.broadcast %cst_125 : f32 to vector<16x1xf32>
    %381 = arith.addf %377, %380 : vector<16x1xf32>
    %382 = math.rsqrt %381 : vector<16x1xf32>
    %383 = vector.broadcast %382 : vector<16x1xf32> to vector<16x32xf32>
    %384 = arith.mulf %379, %383 : vector<16x32xf32>
    %385 = vector.broadcast %223 : vector<1x32xf32> to vector<16x32xf32>
    %386 = arith.mulf %384, %385 : vector<16x32xf32>
    %387 = vector.broadcast %224 : vector<1x32xf32> to vector<16x32xf32>
    %388 = arith.addf %386, %387 : vector<16x32xf32>
    %c2_126 = arith.constant 2 : index
    %c0_127 = arith.constant 0 : index
    %c0_128 = arith.constant 0 : index
    %389 = vector.load %arg3[%c2_126, %c0_127, %c0_128] : memref<3x128x128xf32, #tpu.memory_space<vmem>>, vector<1x32x128xf32>
    %390 = vector.shape_cast %389 : vector<1x32x128xf32> to vector<32x128xf32>
    %c2_129 = arith.constant 2 : index
    %c32_130 = arith.constant 32 : index
    %c0_131 = arith.constant 0 : index
    %391 = vector.load %arg3[%c2_129, %c32_130, %c0_131] : memref<3x128x128xf32, #tpu.memory_space<vmem>>, vector<1x1x128xf32>
    %392 = vector.shape_cast %391 : vector<1x1x128xf32> to vector<1x128xf32>
    %cst_132 = arith.constant dense<0.000000e+00> : vector<16x128xf32>
    %393 = tpu.matmul %388, %390, %cst_132 {dimension_numbers = #tpu.dot_dimension_numbers<[1], [0], [0], [1], [0, 0, 1, 1], [], []>} : vector<16x32xf32>, vector<32x128xf32>, vector<16x128xf32> -> vector<16x128xf32>
    %394 = vector.broadcast %392 : vector<1x128xf32> to vector<16x128xf32>
    %395 = arith.addf %393, %394 : vector<16x128xf32>
    %c0_133 = arith.constant 0 : index
    %c0_134 = arith.constant 0 : index
    %396 = vector.load %arg5[%c0_133, %c0_134] : memref<16x128xf32, #tpu.memory_space<vmem>>, vector<16x128xf32>
    tpu.vector_store %arg5[%c0_133, %c0_134], %395 {strides = array<i32>} : memref<16x128xf32, #tpu.memory_space<vmem>>, vector<16x128xf32>,
    return
  }
}

</mosaic_0001>

<llo_original>
// kernel: bert_language_model.1
$region0: #{bert_language_model.1}
  #allocation0 [shape = 'u32[]', space=smem, size = 0x4, offset = 0x4, fixed_abs, tag = 'smem constant byte address 0x4 - core index']
  #allocation1 [shape = 'u32[72,128]{1,0:T(1,128)}', space=vmem, size = 0x9000, scoped, tag = 'internal scratch']
  %s0 = inlined_call_operand.vmem [shape: s32[16,2], index: 0, kind: input, shape index: {}]
  %s1 = inlined_call_operand.vmem [shape: s32[2,8], index: 1, kind: input, shape index: {}]
  %s2 = inlined_call_operand.vmem [shape: f32[48,32], index: 2, kind: input, shape index: {}]
  %s3 = inlined_call_operand.hbm [shape: f32[3,128,128], index: 3, kind: input, shape index: {}]
  %s4 = inlined_call_operand.vmem [shape: f32[16,128], index: 4, kind: input, shape index: {}]
  %s5 = inlined_call_operand.vmem [shape: f32[16,128], index: 5, kind: output, shape index: {}]
  %s6 = sld [smem:[#allocation0]]
  $region34: #{bert_language_model.1} parent=0
    _
  %s8 = ssub.s32 1, %s6
  %s9 = scalar_select 0, %s8, %s6
  $region1: #{bert_language_model.1} parent=0
    #allocation2 [shape = 'u8[196608]{0}', space=vmem, size = 0x30000, scoped, tag = 'input window, operand 3, single buffered']
    #allocation3 [shape = 's32[1]{0}', space=sflag, size = 0x4, scoped, tag = 'scoped memory for bert_language_model.1']
    %10 = vsyncpa [#allocation3], 0
    // Predicated region
    $region2: #{bert_language_model.1} parent=1 // pred_check
      _
    $region3: #{bert_language_model.1} parent=1 // pred_check_branch
      %12 = sbr.rel (0) target = $region5
    $region4: #{bert_language_model.1} parent=1 // pred_region
      _
    $region5: #{bert_language_model.1} parent=1 // pred_fallthru
      _
    // Predicated region
    $region6: #{bert_language_model.1} parent=1 // pred_check
      _
    $region7: #{bert_language_model.1} parent=1 // pred_check_branch
      %14 = sbr.rel (0) target = $region9
    $region8: #{bert_language_model.1} parent=1 // pred_region
      _
    $region9: #{bert_language_model.1} parent=1 // pred_fallthru
      _
    // Predicated region
    $region10: #{bert_language_model.1} parent=1 // pred_check
      _
    $region11: #{bert_language_model.1} parent=1 // pred_check_branch
      %16 = sbr.rel (0) target = $region13
    $region12: #{bert_language_model.1} parent=1 // pred_region
      _
    $region13: #{bert_language_model.1} parent=1 // pred_fallthru
      _
    // Predicated region
    $region14: #{bert_language_model.1} parent=1 // pred_check
      _
    $region15: #{bert_language_model.1} parent=1 // pred_check_branch
      %18 = sbr.rel (0) target = $region17
    $region16: #{bert_language_model.1} parent=1 // pred_region
      %20 = vsyncadd [#allocation3], 0
      %s21 = sshll.u32 %s3, 4
      %s22 = int_to_ptr.hbm [resolvable:$true] %s21
      %s23 = sshll.u32 [#allocation2], 4
      %s24 = int_to_ptr.vmem [resolvable:$true] %s23
      %29 = dma.hbm_to_vmem [thread:$0]  %s22, 6144, %s24, [#allocation3], 128, 128, 8
    $region17: #{bert_language_model.1} parent=1 // pred_fallthru
      _
    // Predicated region
    $region18: #{bert_language_model.1} parent=1 // pred_check
      _
    $region19: #{bert_language_model.1} parent=1 // pred_check_branch
      %31 = sbr.rel (0) target = $region21
    $region20: #{bert_language_model.1} parent=1 // pred_region
      _
    $region21: #{bert_language_model.1} parent=1 // pred_fallthru
      _
    // Predicated region
    $region22: #{bert_language_model.1} parent=1 // pred_check
      _
    $region23: #{bert_language_model.1} parent=1 // pred_check_branch
      %33 = sbr.rel (0) target = $region25
    $region24: #{bert_language_model.1} parent=1 // pred_region
      %35 = dma.done [#allocation3], 6144
    $region25: #{bert_language_model.1} parent=1 // pred_fallthru
      _
    %v36 = vld [vmem:[%s0] sm:$0xff]
    %v37 = vld [vmem:[%s0 + $0x8] sm:$0xff]
    %v38 = vadd.s32 %v36, 32
    %v39 = vadd.s32 %v37, 32
    %v40 = vlaneseq
    %v41 = vand.u32 %v40, 127
    %42 = vset.pattern.permute.xlu0 0
    %43 = vperm.xlu0 %42, %v36
    %v44 = vpop.permute.xlu0 %43
    %45 = vset.pattern.permute.xlu0 0
    %46 = vperm.xlu0 %45, %v37
    %v47 = vpop.permute.xlu0 %46
    %vm48 = vcmp.eq.s32.totalorder %v41, %v44
    %vm49 = vcmp.eq.s32.totalorder %v41, %v47
    %50 = vset.pattern.permute.xlu0 1
    %51 = vperm.xlu0 %50, %v38
    %v52 = vpop.permute.xlu0 %51
    %53 = vset.pattern.permute.xlu0 1
    %54 = vperm.xlu0 %53, %v39
    %v55 = vpop.permute.xlu0 %54
    %vm56 = vcmp.eq.s32.totalorder %v41, %v52
    %vm57 = vcmp.eq.s32.totalorder %v41, %v55
    %vm58 = vmor %vm48, %vm56
    %vm59 = vmor %vm49, %vm57
    %v60 = vsel %vm58, 1.0, 0.0
    %v61 = vsel %vm59, 1.0, 0.0
    %v62 = vld [vmem:[%s2] sm:$0xff]
    %v63 = vld [vmem:[%s2 + $0x8] sm:$0xff]
    %v64 = vld [vmem:[%s2 + $0x10] sm:$0xff]
    %v65 = vld [vmem:[%s2 + $0x18] sm:$0xff]
    %v66 = vld [vmem:[%s2 + $0x20] sm:$0xff]
    %vm67 = vcmask 326656
    %v69 = vsel %vm67, %v60, 0
    %v72 = vsel %vm67, %v61, 0
    %74 = vmatpush.msra.mxu0 0.0
    %75 = vmatpush.msra.mxu0 0.0
    %76 = vmatpush.msra.mxu0 0.0
    %77 = vmatpush.msra.mxu0 0.0
    %78 = vmatpush.msra.mxu0 0.0
    %79 = vmatpush.msra.mxu0 0.0
    %80 = vmatpush.msra.mxu0 0.0
    %81 = vmatpush.msra.mxu0 0.0
    %82 = vmatpush.msra.mxu0 0.0
    %83 = vmatpush.msra.mxu0 0.0
    %84 = vmatpush.msra.mxu0 0.0
    %85 = vmatpush.msra.mxu0 %v66
    %86 = vmatpush.msra.mxu0 %v65
    %87 = vmatpush.msra.mxu0 %v64
    %88 = vmatpush.msra.mxu0 %v63
    %89 = vmatpush.msra.mxu0 %v62
    %90 = vmatmul.f32.gmra.mxu0 %v69
    %v91 = vpop.f32.mrf.mxu0
    %v92 = vadd.f32 0.0, %v91
    %93 = vmatmul.f32.gmra.mxu0 %v72
    %v94 = vpop.f32.mrf.mxu0
    %v95 = vadd.f32 0.0, %v94
    %96 = vdwg.mxu0
    %v97 = vld [vmem:[%s2 + $0x28] sm:$0xff]
    %v98 = vadd.f32 %v92, %v97
    %v99 = vadd.f32 %v95, %v97
    %v100 = vld [vmem:[%s1] sm:$0x3]
    %vm101 = vcmp.eq.s32.totalorder %v100, 0
    %v102 = vsel %vm101, -1e+09, 0.0
    %v104 = vrot.slane %v102, 1
    %v105 = vld [vmem:[#allocation2] sm:$0xff]
    %v106 = vld [vmem:[#allocation2 + $0x8] sm:$0xff]
    %v107 = vld [vmem:[#allocation2 + $0x10] sm:$0xff]
    %v108 = vld [vmem:[#allocation2 + $0x18] sm:$0xff]
    %v109 = vld [vmem:[#allocation2 + $0x20] sm:$0xff]
    %v110 = vld [vmem:[#allocation2 + $0x28] sm:$0xff]
    %v111 = vld [vmem:[#allocation2 + $0x30] sm:$0xff]
    %v112 = vld [vmem:[#allocation2 + $0x38] sm:$0xff]
    %v113 = vld [vmem:[#allocation2 + $0x40] sm:$0xff]
    %v114 = vld [vmem:[#allocation2 + $0x48] sm:$0xff]
    %v115 = vld [vmem:[#allocation2 + $0x50] sm:$0xff]
    %v116 = vld [vmem:[#allocation2 + $0x58] sm:$0xff]
    %v117 = vld [vmem:[#allocation2 + $0x60] sm:$0xff]
    %v118 = vld [vmem:[#allocation2 + $0x68] sm:$0xff]
    %v119 = vld [vmem:[#allocation2 + $0x70] sm:$0xff]
    %v120 = vld [vmem:[#allocation2 + $0x78] sm:$0xff]
    %v121 = vld [vmem:[%s4] sm:$0x1]
    %v122 = vld [vmem:[%s4 + $0x1] sm:$0x1]
    %v123 = vld [vmem:[%s4 + $0x2] sm:$0x1]
    %v124 = vld [vmem:[%s4 + $0x3] sm:$0x1]
    %v125 = vld [vmem:[%s4 + $0x4] sm:$0x1]
    %v126 = vld [vmem:[%s4 + $0x5] sm:$0x1]
    %v127 = vld [vmem:[%s4 + $0x6] sm:$0x1]
    %v128 = vld [vmem:[%s4 + $0x7] sm:$0x1]
    %v129 = vperm.slane %v121, 0
    %vm130 = vcmask 261120
    %v132 = vsel %vm130, %v98, 0
    %v135 = vsel %vm130, %v99, 0
    %137 = vmatpush.msra.mxu0 0.0
    %138 = vmatpush.msra.mxu0 0.0
    %139 = vmatpush.msra.mxu0 0.0
    %140 = vmatpush.msra.mxu0 0.0
    %141 = vmatpush.msra.mxu0 0.0
    %142 = vmatpush.msra.mxu0 0.0
    %143 = vmatpush.msra.mxu0 0.0
    %144 = vmatpush.msra.mxu0 0.0
    %145 = vmatpush.msra.mxu0 0.0
    %146 = vmatpush.msra.mxu0 0.0
    %147 = vmatpush.msra.mxu0 0.0
    %148 = vmatpush.msra.mxu0 0.0
    %149 = vmatpush.msra.mxu0 %v108
    %150 = vmatpush.msra.mxu0 %v107
    %151 = vmatpush.msra.mxu0 %v106
    %152 = vmatpush.msra.mxu0 %v105
    %153 = vmatmul.f32.gmra.mxu0 %v132
    %v154 = vpop.f32.mrf.mxu0
    %v155 = vadd.f32 %v129, %v154
    %156 = vmatmul.f32.gmra.mxu0 %v135
    %v157 = vpop.f32.mrf.mxu0
    %v158 = vadd.f32 %v129, %v157
    %159 = vdwg.mxu0
    %161 = vrot.lane.b32.xlu0 %v155, 96
    %v162 = vpop.permute.xlu0 %161
    %vm163 = vcmask 64512
    %v164 = vsel %vm163, %v155, 0
    %v166 = vsel %vm163, %v162, 0
    %168 = vmatpush.xpose.msra.mxu0 0.0
    %169 = vmatpush.xpose.msra.mxu0 0.0
    %170 = vmatpush.xpose.msra.mxu0 0.0
    %171 = vmatpush.xpose.msra.mxu0 0.0
    %172 = vmatpush.xpose.msra.mxu0 0.0
    %173 = vmatpush.xpose.msra.mxu0 0.0
    %174 = vmatpush.xpose.msra.mxu0 0.0
    %175 = vmatpush.xpose.msra.mxu0 0.0
    %176 = vmatpush.xpose.msra.mxu0 0.0
    %177 = vmatpush.xpose.msra.mxu0 0.0
    %178 = vmatpush.xpose.msra.mxu0 0.0
    %179 = vmatpush.xpose.msra.mxu0 0.0
    %180 = vmatpush.xpose.msra.mxu0 0.0
    %181 = vmatpush.xpose.msra.mxu0 0.0
    %182 = vmatpush.xpose.msra.mxu0 0.0
    %183 = vmatpush.xpose.msra.mxu0 %v166
    %184 = vmatmul.f32.gmra.mxu0 %v164
    %v185 = vpop.f32.mrf.mxu0
    %v186 = vadd.f32 0.0, %v185
    %187 = vdwg.mxu0
    %189 = vrot.lane.b32.xlu0 %v158, 96
    %v190 = vpop.permute.xlu0 %189
    %v191 = vsel %vm163, %v158, 0
    %v193 = vsel %vm163, %v190, 0
    %195 = vmatpush.xpose.msra.mxu0 0.0
    %196 = vmatpush.xpose.msra.mxu0 0.0
    %197 = vmatpush.xpose.msra.mxu0 0.0
    %198 = vmatpush.xpose.msra.mxu0 0.0
    %199 = vmatpush.xpose.msra.mxu0 0.0
    %200 = vmatpush.xpose.msra.mxu0 0.0
    %201 = vmatpush.xpose.msra.mxu0 0.0
    %202 = vmatpush.xpose.msra.mxu0 0.0
    %203 = vmatpush.xpose.msra.mxu0 0.0
    %204 = vmatpush.xpose.msra.mxu0 0.0
    %205 = vmatpush.xpose.msra.mxu0 0.0
    %206 = vmatpush.xpose.msra.mxu0 0.0
    %207 = vmatpush.xpose.msra.mxu0 0.0
    %208 = vmatpush.xpose.msra.mxu0 0.0
    %209 = vmatpush.xpose.msra.mxu0 0.0
    %210 = vmatpush.xpose.msra.mxu0 %v193
    %211 = vmatmul.f32.gmra.mxu0 %v191
    %v212 = vpop.f32.mrf.mxu0
    %v213 = vadd.f32 0.0, %v212
    %214 = vdwg.mxu0
    %v215 = vmul.f32 %v186, 0.35355338
    %v216 = vmul.f32 %v213, 0.35355338
    %v217 = vperm.slane %v102, 0
    %v218 = vperm.slane %v104, 0
    %v221 = vadd.f32 %v215, %v217
    %v222 = vadd.f32 %v216, %v218
    %v223 = vsel %vm163, %v221, -inf
    %224 = vmax.xlane.f32.xlu0 %v223
    %v225 = vpop.xlane.xlu0 %224
    %v226 = vsel %vm163, %v222, -inf
    %227 = vmax.xlane.f32.xlu0 %v226
    %v228 = vpop.xlane.xlu0 %227
    %v229 = vsub.f32 %v221, %v225
    %v230 = vsub.f32 %v222, %v228
    %v231 = vmul.f32 %v229, 1.442695
    %v232 = vpow.pop %v231
    %v233 = vmul.f32 %v230, 1.442695
    %v234 = vpow.pop %v233
    %v235 = vsel %vm163, %v232, 0.0
    %236 = vadd.xlane.f32.xlu0 %v235
    %v237 = vpop.xlane.xlu0 %236
    %v238 = vsel %vm163, %v234, 0.0
    %239 = vadd.xlane.f32.xlu0 %v238
    %v240 = vpop.xlane.xlu0 %239
    %v241 = vrcp.pop %v237
    %v242 = vmul.f32 %v237, %v241
    %v243 = vsub.f32 1.0, %v242
    %v244 = vmul.f32 %v241, %v243
    %v245 = vadd.f32 %v241, %v244
    %vm246 = vweird.f32 %v237
    %vm247 = vweird.f32 %v241
    %vm248 = vmor %vm246, %vm247
    %v249 = vsel %vm248, %v241, %v245
    %v250 = vand.u32 2147483647, %v237
    %vm251 = vcmp.eq.f32.partialorder %v250, 8.507059e+37
    %v252 = vand.u32 %v237, 2147483648
    %v253 = vor.u32 1.1754944e-38, %v252
    %v254 = vsel %vm251, %v253, %v249
    %v255 = vrcp.pop %v240
    %v256 = vmul.f32 %v240, %v255
    %v257 = vsub.f32 1.0, %v256
    %v258 = vmul.f32 %v255, %v257
    %v259 = vadd.f32 %v255, %v258
    %vm260 = vweird.f32 %v240
    %vm261 = vweird.f32 %v255
    %vm262 = vmor %vm260, %vm261
    %v263 = vsel %vm262, %v255, %v259
    %v264 = vand.u32 2147483647, %v240
    %vm265 = vcmp.eq.f32.partialorder %v264, 8.507059e+37
    %v266 = vand.u32 %v240, 2147483648
    %v267 = vor.u32 1.1754944e-38, %v266
    %v268 = vsel %vm265, %v267, %v263
    %v269 = vmul.f32 %v232, %v254
    %v270 = vmul.f32 %v234, %v268
    %271 = vrot.lane.b32.xlu0 %v155, 64
    %v272 = vpop.permute.xlu0 %271
    %v275 = vsel %vm163, %v269, 0
    %277 = vmatpush.msra.mxu0 0.0
    %278 = vmatpush.msra.mxu0 0.0
    %279 = vmatpush.msra.mxu0 0.0
    %280 = vmatpush.msra.mxu0 0.0
    %281 = vmatpush.msra.mxu0 0.0
    %282 = vmatpush.msra.mxu0 0.0
    %283 = vmatpush.msra.mxu0 0.0
    %284 = vmatpush.msra.mxu0 0.0
    %285 = vmatpush.msra.mxu0 0.0
    %286 = vmatpush.msra.mxu0 0.0
    %287 = vmatpush.msra.mxu0 0.0
    %288 = vmatpush.msra.mxu0 0.0
    %289 = vmatpush.msra.mxu0 0.0
    %290 = vmatpush.msra.mxu0 0.0
    %291 = vmatpush.msra.mxu0 0.0
    %292 = vmatpush.msra.mxu0 %v272
    %293 = vmatmul.f32.gmra.mxu0 %v275
    %v294 = vpop.f32.mrf.mxu0
    %v295 = vadd.f32 0.0, %v294
    %296 = vdwg.mxu0
    %297 = vrot.lane.b32.xlu0 %v158, 64
    %v298 = vpop.permute.xlu0 %297
    %v301 = vsel %vm163, %v270, 0
    %303 = vmatpush.msra.mxu0 0.0
    %304 = vmatpush.msra.mxu0 0.0
    %305 = vmatpush.msra.mxu0 0.0
    %306 = vmatpush.msra.mxu0 0.0
    %307 = vmatpush.msra.mxu0 0.0
    %308 = vmatpush.msra.mxu0 0.0
    %309 = vmatpush.msra.mxu0 0.0
    %310 = vmatpush.msra.mxu0 0.0
    %311 = vmatpush.msra.mxu0 0.0
    %312 = vmatpush.msra.mxu0 0.0
    %313 = vmatpush.msra.mxu0 0.0
    %314 = vmatpush.msra.mxu0 0.0
    %315 = vmatpush.msra.mxu0 0.0
    %316 = vmatpush.msra.mxu0 0.0
    %317 = vmatpush.msra.mxu0 0.0
    %318 = vmatpush.msra.mxu0 %v298
    %319 = vmatmul.f32.gmra.mxu0 %v301
    %v320 = vpop.f32.mrf.mxu0
    %v321 = vadd.f32 0.0, %v320
    %322 = vdwg.mxu0
    %323 = vrot.lane.b32.xlu0 %v155, 120
    %v324 = vpop.permute.xlu0 %323
    %325 = vrot.lane.b32.xlu0 %v155, 88
    %v326 = vpop.permute.xlu0 %325
    %v327 = vsel %vm163, %v324, 0
    %v329 = vsel %vm163, %v326, 0
    %331 = vmatpush.xpose.msra.mxu0 0.0
    %332 = vmatpush.xpose.msra.mxu0 0.0
    %333 = vmatpush.xpose.msra.mxu0 0.0
    %334 = vmatpush.xpose.msra.mxu0 0.0
    %335 = vmatpush.xpose.msra.mxu0 0.0
    %336 = vmatpush.xpose.msra.mxu0 0.0
    %337 = vmatpush.xpose.msra.mxu0 0.0
    %338 = vmatpush.xpose.msra.mxu0 0.0
    %339 = vmatpush.xpose.msra.mxu0 0.0
    %340 = vmatpush.xpose.msra.mxu0 0.0
    %341 = vmatpush.xpose.msra.mxu0 0.0
    %342 = vmatpush.xpose.msra.mxu0 0.0
    %343 = vmatpush.xpose.msra.mxu0 0.0
    %344 = vmatpush.xpose.msra.mxu0 0.0
    %345 = vmatpush.xpose.msra.mxu0 0.0
    %346 = vmatpush.xpose.msra.mxu0 %v329
    %347 = vmatmul.f32.gmra.mxu0 %v327
    %v348 = vpop.f32.mrf.mxu0
    %v349 = vadd.f32 0.0, %v348
    %350 = vdwg.mxu0
    %351 = vrot.lane.b32.xlu0 %v158, 120
    %v352 = vpop.permute.xlu0 %351
    %353 = vrot.lane.b32.xlu0 %v158, 88
    %v354 = vpop.permute.xlu0 %353
    %v355 = vsel %vm163, %v352, 0
    %v357 = vsel %vm163, %v354, 0
    %359 = vmatpush.xpose.msra.mxu0 0.0
    %360 = vmatpush.xpose.msra.mxu0 0.0
    %361 = vmatpush.xpose.msra.mxu0 0.0
    %362 = vmatpush.xpose.msra.mxu0 0.0
    %363 = vmatpush.xpose.msra.mxu0 0.0
    %364 = vmatpush.xpose.msra.mxu0 0.0
    %365 = vmatpush.xpose.msra.mxu0 0.0
    %366 = vmatpush.xpose.msra.mxu0 0.0
    %367 = vmatpush.xpose.msra.mxu0 0.0
    %368 = vmatpush.xpose.msra.mxu0 0.0
    %369 = vmatpush.xpose.msra.mxu0 0.0
    %370 = vmatpush.xpose.msra.mxu0 0.0
    %371 = vmatpush.xpose.msra.mxu0 0.0
    %372 = vmatpush.xpose.msra.mxu0 0.0
    %373 = vmatpush.xpose.msra.mxu0 0.0
    %374 = vmatpush.xpose.msra.mxu0 %v357
    %375 = vmatmul.f32.gmra.mxu0 %v355
    %v376 = vpop.f32.mrf.mxu0
    %v377 = vadd.f32 0.0, %v376
    %378 = vdwg.mxu0
    %v379 = vmul.f32 %v349, 0.35355338
    %v380 = vmul.f32 %v377, 0.35355338
    %v381 = vadd.f32 %v379, %v217
    %v382 = vadd.f32 %v380, %v218
    %v383 = vsel %vm163, %v381, -inf
    %384 = vmax.xlane.f32.xlu0 %v383
    %v385 = vpop.xlane.xlu0 %384
    %v386 = vsel %vm163, %v382, -inf
    %387 = vmax.xlane.f32.xlu0 %v386
    %v388 = vpop.xlane.xlu0 %387
    %v389 = vsub.f32 %v381, %v385
    %v390 = vsub.f32 %v382, %v388
    %v391 = vmul.f32 %v389, 1.442695
    %v392 = vpow.pop %v391
    %v393 = vmul.f32 %v390, 1.442695
    %v394 = vpow.pop %v393
    %v395 = vsel %vm163, %v392, 0.0
    %396 = vadd.xlane.f32.xlu0 %v395
    %v397 = vpop.xlane.xlu0 %396
    %v398 = vsel %vm163, %v394, 0.0
    %399 = vadd.xlane.f32.xlu0 %v398
    %v400 = vpop.xlane.xlu0 %399
    %v401 = vrcp.pop %v397
    %v402 = vmul.f32 %v397, %v401
    %v403 = vsub.f32 1.0, %v402
    %v404 = vmul.f32 %v401, %v403
    %v405 = vadd.f32 %v401, %v404
    %vm406 = vweird.f32 %v397
    %vm407 = vweird.f32 %v401
    %vm408 = vmor %vm406, %vm407
    %v409 = vsel %vm408, %v401, %v405
    %v410 = vand.u32 2147483647, %v397
    %vm411 = vcmp.eq.f32.partialorder %v410, 8.507059e+37
    %v412 = vand.u32 %v397, 2147483648
    %v413 = vor.u32 1.1754944e-38, %v412
    %v414 = vsel %vm411, %v413, %v409
    %v415 = vrcp.pop %v400
    %v416 = vmul.f32 %v400, %v415
    %v417 = vsub.f32 1.0, %v416
    %v418 = vmul.f32 %v415, %v417
    %v419 = vadd.f32 %v415, %v418
    %vm420 = vweird.f32 %v400
    %vm421 = vweird.f32 %v415
    %vm422 = vmor %vm420, %vm421
    %v423 = vsel %vm422, %v415, %v419
    %v424 = vand.u32 2147483647, %v400
    %vm425 = vcmp.eq.f32.partialorder %v424, 8.507059e+37
    %v426 = vand.u32 %v400, 2147483648
    %v427 = vor.u32 1.1754944e-38, %v426
    %v428 = vsel %vm425, %v427, %v423
    %v429 = vmul.f32 %v392, %v414
    %v430 = vmul.f32 %v394, %v428
    %431 = vrot.lane.b32.xlu0 %v155, 56
    %v432 = vpop.permute.xlu0 %431
    %v435 = vsel %vm163, %v429, 0
    %437 = vmatpush.msra.mxu0 0.0
    %438 = vmatpush.msra.mxu0 0.0
    %439 = vmatpush.msra.mxu0 0.0
    %440 = vmatpush.msra.mxu0 0.0
    %441 = vmatpush.msra.mxu0 0.0
    %442 = vmatpush.msra.mxu0 0.0
    %443 = vmatpush.msra.mxu0 0.0
    %444 = vmatpush.msra.mxu0 0.0
    %445 = vmatpush.msra.mxu0 0.0
    %446 = vmatpush.msra.mxu0 0.0
    %447 = vmatpush.msra.mxu0 0.0
    %448 = vmatpush.msra.mxu0 0.0
    %449 = vmatpush.msra.mxu0 0.0
    %450 = vmatpush.msra.mxu0 0.0
    %451 = vmatpush.msra.mxu0 0.0
    %452 = vmatpush.msra.mxu0 %v432
    %453 = vmatmul.f32.gmra.mxu0 %v435
    %v454 = vpop.f32.mrf.mxu0
    %v455 = vadd.f32 0.0, %v454
    %456 = vdwg.mxu0
    %457 = vrot.lane.b32.xlu0 %v158, 56
    %v458 = vpop.permute.xlu0 %457
    %v461 = vsel %vm163, %v430, 0
    %463 = vmatpush.msra.mxu0 0.0
    %464 = vmatpush.msra.mxu0 0.0
    %465 = vmatpush.msra.mxu0 0.0
    %466 = vmatpush.msra.mxu0 0.0
    %467 = vmatpush.msra.mxu0 0.0
    %468 = vmatpush.msra.mxu0 0.0
    %469 = vmatpush.msra.mxu0 0.0
    %470 = vmatpush.msra.mxu0 0.0
    %471 = vmatpush.msra.mxu0 0.0
    %472 = vmatpush.msra.mxu0 0.0
    %473 = vmatpush.msra.mxu0 0.0
    %474 = vmatpush.msra.mxu0 0.0
    %475 = vmatpush.msra.mxu0 0.0
    %476 = vmatpush.msra.mxu0 0.0
    %477 = vmatpush.msra.mxu0 0.0
    %478 = vmatpush.msra.mxu0 %v458
    %479 = vmatmul.f32.gmra.mxu0 %v461
    %v480 = vpop.f32.mrf.mxu0
    %v481 = vadd.f32 0.0, %v480
    %482 = vdwg.mxu0
    %484 = vrot.lane.b32.xlu0 %v106, 32
    %v485 = vpop.permute.xlu0 %484
    %v488 = vsel %vm163, %v455, 0
    %v491 = vsel %vm163, %v481, 0
    %493 = vmatpush.msra.mxu0 0.0
    %494 = vmatpush.msra.mxu0 0.0
    %495 = vmatpush.msra.mxu0 0.0
    %496 = vmatpush.msra.mxu0 0.0
    %497 = vmatpush.msra.mxu0 0.0
    %498 = vmatpush.msra.mxu0 0.0
    %499 = vmatpush.msra.mxu0 0.0
    %500 = vmatpush.msra.mxu0 0.0
    %501 = vmatpush.msra.mxu0 0.0
    %502 = vmatpush.msra.mxu0 0.0
    %503 = vmatpush.msra.mxu0 0.0
    %504 = vmatpush.msra.mxu0 0.0
    %505 = vmatpush.msra.mxu0 0.0
    %506 = vmatpush.msra.mxu0 0.0
    %507 = vmatpush.msra.mxu0 0.0
    %508 = vmatpush.msra.mxu0 %v485
    %509 = vmatmul.f32.gmra.mxu0 %v488
    %v510 = vpop.f32.mrf.mxu0
    %v511 = vadd.f32 0.0, %v510
    %512 = vmatmul.f32.gmra.mxu0 %v491
    %v513 = vpop.f32.mrf.mxu0
    %v514 = vadd.f32 0.0, %v513
    %515 = vdwg.mxu0
    %517 = vrot.lane.b32.xlu0 %v105, 32
    %v518 = vpop.permute.xlu0 %517
    %v521 = vsel %vm163, %v295, 0
    %v524 = vsel %vm163, %v321, 0
    %526 = vmatpush.msra.mxu0 0.0
    %527 = vmatpush.msra.mxu0 0.0
    %528 = vmatpush.msra.mxu0 0.0
    %529 = vmatpush.msra.mxu0 0.0
    %530 = vmatpush.msra.mxu0 0.0
    %531 = vmatpush.msra.mxu0 0.0
    %532 = vmatpush.msra.mxu0 0.0
    %533 = vmatpush.msra.mxu0 0.0
    %534 = vmatpush.msra.mxu0 0.0
    %535 = vmatpush.msra.mxu0 0.0
    %536 = vmatpush.msra.mxu0 0.0
    %537 = vmatpush.msra.mxu0 0.0
    %538 = vmatpush.msra.mxu0 0.0
    %539 = vmatpush.msra.mxu0 0.0
    %540 = vmatpush.msra.mxu0 0.0
    %541 = vmatpush.msra.mxu0 %v518
    %542 = vmatmul.f32.gmra.mxu0 %v521
    %v543 = vpop.f32.mrf.mxu0
    %v544 = vadd.f32 %v511, %v543
    %545 = vmatmul.f32.gmra.mxu0 %v524
    %v546 = vpop.f32.mrf.mxu0
    %v547 = vadd.f32 %v514, %v546
    %548 = vdwg.mxu0
    %549 = vrot.lane.b32.xlu0 %v155, 112
    %v550 = vpop.permute.xlu0 %549
    %551 = vrot.lane.b32.xlu0 %v155, 80
    %v552 = vpop.permute.xlu0 %551
    %v553 = vsel %vm163, %v550, 0
    %v555 = vsel %vm163, %v552, 0
    %557 = vmatpush.xpose.msra.mxu0 0.0
    %558 = vmatpush.xpose.msra.mxu0 0.0
    %559 = vmatpush.xpose.msra.mxu0 0.0
    %560 = vmatpush.xpose.msra.mxu0 0.0
    %561 = vmatpush.xpose.msra.mxu0 0.0
    %562 = vmatpush.xpose.msra.mxu0 0.0
    %563 = vmatpush.xpose.msra.mxu0 0.0
    %564 = vmatpush.xpose.msra.mxu0 0.0
    %565 = vmatpush.xpose.msra.mxu0 0.0
    %566 = vmatpush.xpose.msra.mxu0 0.0
    %567 = vmatpush.xpose.msra.mxu0 0.0
    %568 = vmatpush.xpose.msra.mxu0 0.0
    %569 = vmatpush.xpose.msra.mxu0 0.0
    %570 = vmatpush.xpose.msra.mxu0 0.0
    %571 = vmatpush.xpose.msra.mxu0 0.0
    %572 = vmatpush.xpose.msra.mxu0 %v555
    %573 = vmatmul.f32.gmra.mxu0 %v553
    %v574 = vpop.f32.mrf.mxu0
    %v575 = vadd.f32 0.0, %v574
    %576 = vdwg.mxu0
    %577 = vrot.lane.b32.xlu0 %v158, 112
    %v578 = vpop.permute.xlu0 %577
    %579 = vrot.lane.b32.xlu0 %v158, 80
    %v580 = vpop.permute.xlu0 %579
    %v581 = vsel %vm163, %v578, 0
    %v583 = vsel %vm163, %v580, 0
    %585 = vmatpush.xpose.msra.mxu0 0.0
    %586 = vmatpush.xpose.msra.mxu0 0.0
    %587 = vmatpush.xpose.msra.mxu0 0.0
    %588 = vmatpush.xpose.msra.mxu0 0.0
    %589 = vmatpush.xpose.msra.mxu0 0.0
    %590 = vmatpush.xpose.msra.mxu0 0.0
    %591 = vmatpush.xpose.msra.mxu0 0.0
    %592 = vmatpush.xpose.msra.mxu0 0.0
    %593 = vmatpush.xpose.msra.mxu0 0.0
    %594 = vmatpush.xpose.msra.mxu0 0.0
    %595 = vmatpush.xpose.msra.mxu0 0.0
    %596 = vmatpush.xpose.msra.mxu0 0.0
    %597 = vmatpush.xpose.msra.mxu0 0.0
    %598 = vmatpush.xpose.msra.mxu0 0.0
    %599 = vmatpush.xpose.msra.mxu0 0.0
    %600 = vmatpush.xpose.msra.mxu0 %v583
    %601 = vmatmul.f32.gmra.mxu0 %v581
    %v602 = vpop.f32.mrf.mxu0
    %v603 = vadd.f32 0.0, %v602
    %604 = vdwg.mxu0
    %v605 = vmul.f32 %v575, 0.35355338
    %v606 = vmul.f32 %v603, 0.35355338
    %v607 = vadd.f32 %v605, %v217
    %v608 = vadd.f32 %v606, %v218
    %v609 = vsel %vm163, %v607, -inf
    %610 = vmax.xlane.f32.xlu0 %v609
    %v611 = vpop.xlane.xlu0 %610
    %v612 = vsel %vm163, %v608, -inf
    %613 = vmax.xlane.f32.xlu0 %v612
    %v614 = vpop.xlane.xlu0 %613
    %v615 = vsub.f32 %v607, %v611
    %v616 = vsub.f32 %v608, %v614
    %v617 = vmul.f32 %v615, 1.442695
    %v618 = vpow.pop %v617
    %v619 = vmul.f32 %v616, 1.442695
    %v620 = vpow.pop %v619
    %v621 = vsel %vm163, %v618, 0.0
    %622 = vadd.xlane.f32.xlu0 %v621
    %v623 = vpop.xlane.xlu0 %622
    %v624 = vsel %vm163, %v620, 0.0
    %625 = vadd.xlane.f32.xlu0 %v624
    %v626 = vpop.xlane.xlu0 %625
    %v627 = vrcp.pop %v623
    %v628 = vmul.f32 %v623, %v627
    %v629 = vsub.f32 1.0, %v628
    %v630 = vmul.f32 %v627, %v629
    %v631 = vadd.f32 %v627, %v630
    %vm632 = vweird.f32 %v623
    %vm633 = vweird.f32 %v627
    %vm634 = vmor %vm632, %vm633
    %v635 = vsel %vm634, %v627, %v631
    %v636 = vand.u32 2147483647, %v623
    %vm637 = vcmp.eq.f32.partialorder %v636, 8.507059e+37
    %v638 = vand.u32 %v623, 2147483648
    %v639 = vor.u32 1.1754944e-38, %v638
    %v640 = vsel %vm637, %v639, %v635
    %v641 = vrcp.pop %v626
    %v642 = vmul.f32 %v626, %v641
    %v643 = vsub.f32 1.0, %v642
    %v644 = vmul.f32 %v641, %v643
    %v645 = vadd.f32 %v641, %v644
    %vm646 = vweird.f32 %v626
    %vm647 = vweird.f32 %v641
    %vm648 = vmor %vm646, %vm647
    %v649 = vsel %vm648, %v641, %v645
    %v650 = vand.u32 2147483647, %v626
    %vm651 = vcmp.eq.f32.partialorder %v650, 8.507059e+37
    %v652 = vand.u32 %v626, 2147483648
    %v653 = vor.u32 1.1754944e-38, %v652
    %v654 = vsel %vm651, %v653, %v649
    %v655 = vmul.f32 %v618, %v640
    %v656 = vmul.f32 %v620, %v654
    %657 = vrot.lane.b32.xlu0 %v155, 48
    %v658 = vpop.permute.xlu0 %657
    %v661 = vsel %vm163, %v655, 0
    %663 = vmatpush.msra.mxu0 0.0
    %664 = vmatpush.msra.mxu0 0.0
    %665 = vmatpush.msra.mxu0 0.0
    %666 = vmatpush.msra.mxu0 0.0
    %667 = vmatpush.msra.mxu0 0.0
    %668 = vmatpush.msra.mxu0 0.0
    %669 = vmatpush.msra.mxu0 0.0
    %670 = vmatpush.msra.mxu0 0.0
    %671 = vmatpush.msra.mxu0 0.0
    %672 = vmatpush.msra.mxu0 0.0
    %673 = vmatpush.msra.mxu0 0.0
    %674 = vmatpush.msra.mxu0 0.0
    %675 = vmatpush.msra.mxu0 0.0
    %676 = vmatpush.msra.mxu0 0.0
    %677 = vmatpush.msra.mxu0 0.0
    %678 = vmatpush.msra.mxu0 %v658
    %679 = vmatmul.f32.gmra.mxu0 %v661
    %v680 = vpop.f32.mrf.mxu0
    %v681 = vadd.f32 0.0, %v680
    %682 = vdwg.mxu0
    %683 = vrot.lane.b32.xlu0 %v158, 48
    %v684 = vpop.permute.xlu0 %683
    %v687 = vsel %vm163, %v656, 0
    %689 = vmatpush.msra.mxu0 0.0
    %690 = vmatpush.msra.mxu0 0.0
    %691 = vmatpush.msra.mxu0 0.0
    %692 = vmatpush.msra.mxu0 0.0
    %693 = vmatpush.msra.mxu0 0.0
    %694 = vmatpush.msra.mxu0 0.0
    %695 = vmatpush.msra.mxu0 0.0
    %696 = vmatpush.msra.mxu0 0.0
    %697 = vmatpush.msra.mxu0 0.0
    %698 = vmatpush.msra.mxu0 0.0
    %699 = vmatpush.msra.mxu0 0.0
    %700 = vmatpush.msra.mxu0 0.0
    %701 = vmatpush.msra.mxu0 0.0
    %702 = vmatpush.msra.mxu0 0.0
    %703 = vmatpush.msra.mxu0 0.0
    %704 = vmatpush.msra.mxu0 %v684
    %705 = vmatmul.f32.gmra.mxu0 %v687
    %v706 = vpop.f32.mrf.mxu0
    %v707 = vadd.f32 0.0, %v706
    %708 = vdwg.mxu0
    %710 = vrot.lane.b32.xlu0 %v107, 32
    %v711 = vpop.permute.xlu0 %710
    %v714 = vsel %vm163, %v681, 0
    %v717 = vsel %vm163, %v707, 0
    %719 = vmatpush.msra.mxu0 0.0
    %720 = vmatpush.msra.mxu0 0.0
    %721 = vmatpush.msra.mxu0 0.0
    %722 = vmatpush.msra.mxu0 0.0
    %723 = vmatpush.msra.mxu0 0.0
    %724 = vmatpush.msra.mxu0 0.0
    %725 = vmatpush.msra.mxu0 0.0
    %726 = vmatpush.msra.mxu0 0.0
    %727 = vmatpush.msra.mxu0 0.0
    %728 = vmatpush.msra.mxu0 0.0
    %729 = vmatpush.msra.mxu0 0.0
    %730 = vmatpush.msra.mxu0 0.0
    %731 = vmatpush.msra.mxu0 0.0
    %732 = vmatpush.msra.mxu0 0.0
    %733 = vmatpush.msra.mxu0 0.0
    %734 = vmatpush.msra.mxu0 %v711
    %735 = vmatmul.f32.gmra.mxu0 %v714
    %v736 = vpop.f32.mrf.mxu0
    %v737 = vadd.f32 0.0, %v736
    %738 = vmatmul.f32.gmra.mxu0 %v717
    %v739 = vpop.f32.mrf.mxu0
    %v740 = vadd.f32 0.0, %v739
    %741 = vdwg.mxu0
    %v742 = vadd.f32 %v544, %v737
    %v743 = vadd.f32 %v547, %v740
    %744 = vrot.lane.b32.xlu0 %v155, 104
    %v745 = vpop.permute.xlu0 %744
    %746 = vrot.lane.b32.xlu0 %v155, 72
    %v747 = vpop.permute.xlu0 %746
    %v748 = vsel %vm163, %v745, 0
    %v750 = vsel %vm163, %v747, 0
    %752 = vmatpush.xpose.msra.mxu0 0.0
    %753 = vmatpush.xpose.msra.mxu0 0.0
    %754 = vmatpush.xpose.msra.mxu0 0.0
    %755 = vmatpush.xpose.msra.mxu0 0.0
    %756 = vmatpush.xpose.msra.mxu0 0.0
    %757 = vmatpush.xpose.msra.mxu0 0.0
    %758 = vmatpush.xpose.msra.mxu0 0.0
    %759 = vmatpush.xpose.msra.mxu0 0.0
    %760 = vmatpush.xpose.msra.mxu0 0.0
    %761 = vmatpush.xpose.msra.mxu0 0.0
    %762 = vmatpush.xpose.msra.mxu0 0.0
    %763 = vmatpush.xpose.msra.mxu0 0.0
    %764 = vmatpush.xpose.msra.mxu0 0.0
    %765 = vmatpush.xpose.msra.mxu0 0.0
    %766 = vmatpush.xpose.msra.mxu0 0.0
    %767 = vmatpush.xpose.msra.mxu0 %v750
    %768 = vmatmul.f32.gmra.mxu0 %v748
    %v769 = vpop.f32.mrf.mxu0
    %v770 = vadd.f32 0.0, %v769
    %771 = vdwg.mxu0
    %772 = vrot.lane.b32.xlu0 %v158, 104
    %v773 = vpop.permute.xlu0 %772
    %774 = vrot.lane.b32.xlu0 %v158, 72
    %v775 = vpop.permute.xlu0 %774
    %v776 = vsel %vm163, %v773, 0
    %v778 = vsel %vm163, %v775, 0
    %780 = vmatpush.xpose.msra.mxu0 0.0
    %781 = vmatpush.xpose.msra.mxu0 0.0
    %782 = vmatpush.xpose.msra.mxu0 0.0
    %783 = vmatpush.xpose.msra.mxu0 0.0
    %784 = vmatpush.xpose.msra.mxu0 0.0
    %785 = vmatpush.xpose.msra.mxu0 0.0
    %786 = vmatpush.xpose.msra.mxu0 0.0
    %787 = vmatpush.xpose.msra.mxu0 0.0
    %788 = vmatpush.xpose.msra.mxu0 0.0
    %789 = vmatpush.xpose.msra.mxu0 0.0
    %790 = vmatpush.xpose.msra.mxu0 0.0
    %791 = vmatpush.xpose.msra.mxu0 0.0
    %792 = vmatpush.xpose.msra.mxu0 0.0
    %793 = vmatpush.xpose.msra.mxu0 0.0
    %794 = vmatpush.xpose.msra.mxu0 0.0
    %795 = vmatpush.xpose.msra.mxu0 %v778
    %796 = vmatmul.f32.gmra.mxu0 %v776
    %v797 = vpop.f32.mrf.mxu0
    %v798 = vadd.f32 0.0, %v797
    %799 = vdwg.mxu0
    %v800 = vmul.f32 %v770, 0.35355338
    %v801 = vmul.f32 %v798, 0.35355338
    %v802 = vadd.f32 %v800, %v217
    %v803 = vadd.f32 %v801, %v218
    %v804 = vsel %vm163, %v802, -inf
    %805 = vmax.xlane.f32.xlu0 %v804
    %v806 = vpop.xlane.xlu0 %805
    %v807 = vsel %vm163, %v803, -inf
    %808 = vmax.xlane.f32.xlu0 %v807
    %v809 = vpop.xlane.xlu0 %808
    %v810 = vsub.f32 %v802, %v806
    %v811 = vsub.f32 %v803, %v809
    %v812 = vmul.f32 %v810, 1.442695
    %v813 = vpow.pop %v812
    %v814 = vmul.f32 %v811, 1.442695
    %v815 = vpow.pop %v814
    %v816 = vsel %vm163, %v813, 0.0
    %817 = vadd.xlane.f32.xlu0 %v816
    %v818 = vpop.xlane.xlu0 %817
    %v819 = vsel %vm163, %v815, 0.0
    %820 = vadd.xlane.f32.xlu0 %v819
    %v821 = vpop.xlane.xlu0 %820
    %v822 = vrcp.pop %v818
    %v823 = vmul.f32 %v818, %v822
    %v824 = vsub.f32 1.0, %v823
    %v825 = vmul.f32 %v822, %v824
    %v826 = vadd.f32 %v822, %v825
    %vm827 = vweird.f32 %v818
    %vm828 = vweird.f32 %v822
    %vm829 = vmor %vm827, %vm828
    %v830 = vsel %vm829, %v822, %v826
    %v831 = vand.u32 2147483647, %v818
    %vm832 = vcmp.eq.f32.partialorder %v831, 8.507059e+37
    %v833 = vand.u32 %v818, 2147483648
    %v834 = vor.u32 1.1754944e-38, %v833
    %v835 = vsel %vm832, %v834, %v830
    %v836 = vrcp.pop %v821
    %v837 = vmul.f32 %v821, %v836
    %v838 = vsub.f32 1.0, %v837
    %v839 = vmul.f32 %v836, %v838
    %v840 = vadd.f32 %v836, %v839
    %vm841 = vweird.f32 %v821
    %vm842 = vweird.f32 %v836
    %vm843 = vmor %vm841, %vm842
    %v844 = vsel %vm843, %v836, %v840
    %v845 = vand.u32 2147483647, %v821
    %vm846 = vcmp.eq.f32.partialorder %v845, 8.507059e+37
    %v847 = vand.u32 %v821, 2147483648
    %v848 = vor.u32 1.1754944e-38, %v847
    %v849 = vsel %vm846, %v848, %v844
    %v850 = vmul.f32 %v813, %v835
    %v851 = vmul.f32 %v815, %v849
    %852 = vrot.lane.b32.xlu0 %v155, 40
    %v853 = vpop.permute.xlu0 %852
    %v856 = vsel %vm163, %v850, 0
    %858 = vmatpush.msra.mxu0 0.0
    %859 = vmatpush.msra.mxu0 0.0
    %860 = vmatpush.msra.mxu0 0.0
    %861 = vmatpush.msra.mxu0 0.0
    %862 = vmatpush.msra.mxu0 0.0
    %863 = vmatpush.msra.mxu0 0.0
    %864 = vmatpush.msra.mxu0 0.0
    %865 = vmatpush.msra.mxu0 0.0
    %866 = vmatpush.msra.mxu0 0.0
    %867 = vmatpush.msra.mxu0 0.0
    %868 = vmatpush.msra.mxu0 0.0
    %869 = vmatpush.msra.mxu0 0.0
    %870 = vmatpush.msra.mxu0 0.0
    %871 = vmatpush.msra.mxu0 0.0
    %872 = vmatpush.msra.mxu0 0.0
    %873 = vmatpush.msra.mxu0 %v853
    %874 = vmatmul.f32.gmra.mxu0 %v856
    %v875 = vpop.f32.mrf.mxu0
    %v876 = vadd.f32 0.0, %v875
    %877 = vdwg.mxu0
    %878 = vrot.lane.b32.xlu0 %v158, 40
    %v879 = vpop.permute.xlu0 %878
    %v882 = vsel %vm163, %v851, 0
    %884 = vmatpush.msra.mxu0 0.0
    %885 = vmatpush.msra.mxu0 0.0
    %886 = vmatpush.msra.mxu0 0.0
    %887 = vmatpush.msra.mxu0 0.0
    %888 = vmatpush.msra.mxu0 0.0
    %889 = vmatpush.msra.mxu0 0.0
    %890 = vmatpush.msra.mxu0 0.0
    %891 = vmatpush.msra.mxu0 0.0
    %892 = vmatpush.msra.mxu0 0.0
    %893 = vmatpush.msra.mxu0 0.0
    %894 = vmatpush.msra.mxu0 0.0
    %895 = vmatpush.msra.mxu0 0.0
    %896 = vmatpush.msra.mxu0 0.0
    %897 = vmatpush.msra.mxu0 0.0
    %898 = vmatpush.msra.mxu0 0.0
    %899 = vmatpush.msra.mxu0 %v879
    %900 = vmatmul.f32.gmra.mxu0 %v882
    %v901 = vpop.f32.mrf.mxu0
    %v902 = vadd.f32 0.0, %v901
    %903 = vdwg.mxu0
    %905 = vrot.lane.b32.xlu0 %v108, 32
    %v906 = vpop.permute.xlu0 %905
    %v909 = vsel %vm163, %v876, 0
    %v912 = vsel %vm163, %v902, 0
    %914 = vmatpush.msra.mxu0 0.0
    %915 = vmatpush.msra.mxu0 0.0
    %916 = vmatpush.msra.mxu0 0.0
    %917 = vmatpush.msra.mxu0 0.0
    %918 = vmatpush.msra.mxu0 0.0
    %919 = vmatpush.msra.mxu0 0.0
    %920 = vmatpush.msra.mxu0 0.0
    %921 = vmatpush.msra.mxu0 0.0
    %922 = vmatpush.msra.mxu0 0.0
    %923 = vmatpush.msra.mxu0 0.0
    %924 = vmatpush.msra.mxu0 0.0
    %925 = vmatpush.msra.mxu0 0.0
    %926 = vmatpush.msra.mxu0 0.0
    %927 = vmatpush.msra.mxu0 0.0
    %928 = vmatpush.msra.mxu0 0.0
    %929 = vmatpush.msra.mxu0 %v906
    %930 = vmatmul.f32.gmra.mxu0 %v909
    %v931 = vpop.f32.mrf.mxu0
    %v932 = vadd.f32 0.0, %v931
    %933 = vmatmul.f32.gmra.mxu0 %v912
    %v934 = vpop.f32.mrf.mxu0
    %v935 = vadd.f32 0.0, %v934
    %936 = vdwg.mxu0
    %v937 = vadd.f32 %v742, %v932
    %v938 = vadd.f32 %v743, %v935
    %v939 = vperm.slane %v123, 0
    %v940 = vadd.f32 %v937, %v939
    %v941 = vadd.f32 %v938, %v939
    %v942 = vadd.f32 %v98, %v940
    %v943 = vadd.f32 %v99, %v941
    %v944 = vsel %vm130, %v942, 0.0
    %945 = vadd.xlane.f32.xlu0 %v944
    %v946 = vpop.xlane.xlu0 %945
    %v947 = vsel %vm130, %v943, 0.0
    %948 = vadd.xlane.f32.xlu0 %v947
    %v949 = vpop.xlane.xlu0 %948
    %v950 = vrcp.pop 32.0
    %v951 = vmul.f32 32.0, %v950
    %v952 = vsub.f32 1.0, %v951
    %v953 = vmul.f32 %v950, %v952
    %v954 = vadd.f32 %v950, %v953
    %vm955 = vweird.f32 %v950
    %v956 = vsel %vm955, %v950, %v954
    %v957 = vmul.f32 %v946, %v956
    %v958 = vmul.f32 %v949, %v956
    %v959 = vsub.f32 %v942, %v957
    %v960 = vsub.f32 %v943, %v958
    %v961 = vmul.f32 %v959, %v959
    %v962 = vmul.f32 %v960, %v960
    %v963 = vsel %vm130, %v961, 0.0
    %964 = vadd.xlane.f32.xlu0 %v963
    %v965 = vpop.xlane.xlu0 %964
    %v966 = vsel %vm130, %v962, 0.0
    %967 = vadd.xlane.f32.xlu0 %v966
    %v968 = vpop.xlane.xlu0 %967
    %v969 = vmul.f32 %v965, %v956
    %v970 = vmul.f32 %v968, %v956
    %v971 = vadd.f32 %v969, 1e-05
    %v972 = vadd.f32 %v970, 1e-05
    %v973 = vrsqrt.pop %v971
    %v974 = vmul.f32 %v973, %v971
    %v975 = vmul.f32 %v974, %v973
    %v976 = vmul.f32 0.5, %v975
    %v977 = vsub.f32 1.5, %v976
    %v978 = vmul.f32 %v973, %v977
    %vm979 = vweird.f32 %v971
    %vm980 = vweird.f32 %v973
    %vm981 = vmor %vm979, %vm980
    %v982 = vsel %vm981, %v973, %v978
    %v983 = vrsqrt.pop %v972
    %v984 = vmul.f32 %v983, %v972
    %v985 = vmul.f32 %v984, %v983
    %v986 = vmul.f32 0.5, %v985
    %v987 = vsub.f32 1.5, %v986
    %v988 = vmul.f32 %v983, %v987
    %vm989 = vweird.f32 %v972
    %vm990 = vweird.f32 %v983
    %vm991 = vmor %vm989, %vm990
    %v992 = vsel %vm991, %v983, %v988
    %v993 = vmul.f32 %v959, %v982
    %v994 = vmul.f32 %v960, %v992
    %v995 = vperm.slane %v125, 0
    %v996 = vmul.f32 %v993, %v995
    %v997 = vmul.f32 %v994, %v995
    %v998 = vperm.slane %v126, 0
    %v999 = vadd.f32 %v996, %v998
    %v1000 = vadd.f32 %v997, %v998
    %v1001 = vperm.slane %v122, 0
    %v1003 = vsel %vm130, %v999, 0
    %v1006 = vsel %vm130, %v1000, 0
    %1008 = vmatpush.msra.mxu0 0.0
    %1009 = vmatpush.msra.mxu0 0.0
    %1010 = vmatpush.msra.mxu0 0.0
    %1011 = vmatpush.msra.mxu0 0.0
    %1012 = vmatpush.msra.mxu0 0.0
    %1013 = vmatpush.msra.mxu0 0.0
    %1014 = vmatpush.msra.mxu0 0.0
    %1015 = vmatpush.msra.mxu0 0.0
    %1016 = vmatpush.msra.mxu0 0.0
    %1017 = vmatpush.msra.mxu0 0.0
    %1018 = vmatpush.msra.mxu0 0.0
    %1019 = vmatpush.msra.mxu0 0.0
    %1020 = vmatpush.msra.mxu0 %v112
    %1021 = vmatpush.msra.mxu0 %v111
    %1022 = vmatpush.msra.mxu0 %v110
    %1023 = vmatpush.msra.mxu0 %v109
    %1024 = vmatmul.f32.gmra.mxu0 %v1003
    %v1025 = vpop.f32.mrf.mxu0
    %v1026 = vadd.f32 %v1001, %v1025
    %1027 = vmatmul.f32.gmra.mxu0 %v1006
    %v1028 = vpop.f32.mrf.mxu0
    %v1029 = vadd.f32 %v1001, %v1028
    %1030 = vdwg.mxu0
    %v1031 = vmax.f32 %v1026, 0.0
    %v1032 = vmax.f32 %v1029, 0.0
    %v1033 = vperm.slane %v124, 0
    %vm1034 = vcmask 523264
    %v1036 = vsel %vm1034, %v1031, 0
    %v1039 = vsel %vm1034, %v1032, 0
    %1041 = vmatpush.msra.mxu0 0.0
    %1042 = vmatpush.msra.mxu0 0.0
    %1043 = vmatpush.msra.mxu0 0.0
    %1044 = vmatpush.msra.mxu0 0.0
    %1045 = vmatpush.msra.mxu0 0.0
    %1046 = vmatpush.msra.mxu0 0.0
    %1047 = vmatpush.msra.mxu0 0.0
    %1048 = vmatpush.msra.mxu0 0.0
    %1049 = vmatpush.msra.mxu0 %v120
    %1050 = vmatpush.msra.mxu0 %v119
    %1051 = vmatpush.msra.mxu0 %v118
    %1052 = vmatpush.msra.mxu0 %v117
    %1053 = vmatpush.msra.mxu0 %v116
    %1054 = vmatpush.msra.mxu0 %v115
    %1055 = vmatpush.msra.mxu0 %v114
    %1056 = vmatpush.msra.mxu0 %v113
    %1057 = vmatmul.f32.gmra.mxu0 %v1036
    %v1058 = vpop.f32.mrf.mxu0
    %v1059 = vadd.f32 %v1033, %v1058
    %1060 = vmatmul.f32.gmra.mxu0 %v1039
    %v1061 = vpop.f32.mrf.mxu0
    %v1062 = vadd.f32 %v1033, %v1061
    %1063 = vdwg.mxu0
    %v1064 = vadd.f32 %v999, %v1059
    %v1065 = vadd.f32 %v1000, %v1062
    %v1066 = vsel %vm130, %v1064, 0.0
    %1067 = vadd.xlane.f32.xlu0 %v1066
    %v1068 = vpop.xlane.xlu0 %1067
    %v1069 = vsel %vm130, %v1065, 0.0
    %1070 = vadd.xlane.f32.xlu0 %v1069
    %v1071 = vpop.xlane.xlu0 %1070
    %v1072 = vmul.f32 %v1068, %v956
    %v1073 = vmul.f32 %v1071, %v956
    %v1074 = vsub.f32 %v1064, %v1072
    %v1075 = vsub.f32 %v1065, %v1073
    %v1076 = vmul.f32 %v1074, %v1074
    %v1077 = vmul.f32 %v1075, %v1075
    %v1078 = vsel %vm130, %v1076, 0.0
    %1079 = vadd.xlane.f32.xlu0 %v1078
    %v1080 = vpop.xlane.xlu0 %1079
    %v1081 = vsel %vm130, %v1077, 0.0
    %1082 = vadd.xlane.f32.xlu0 %v1081
    %v1083 = vpop.xlane.xlu0 %1082
    %v1084 = vmul.f32 %v1080, %v956
    %v1085 = vmul.f32 %v1083, %v956
    %v1086 = vadd.f32 %v1084, 1e-05
    %v1087 = vadd.f32 %v1085, 1e-05
    %v1088 = vrsqrt.pop %v1086
    %v1089 = vmul.f32 %v1088, %v1086
    %v1090 = vmul.f32 %v1089, %v1088
    %v1091 = vmul.f32 0.5, %v1090
    %v1092 = vsub.f32 1.5, %v1091
    %v1093 = vmul.f32 %v1088, %v1092
    %vm1094 = vweird.f32 %v1086
    %vm1095 = vweird.f32 %v1088
    %vm1096 = vmor %vm1094, %vm1095
    %v1097 = vsel %vm1096, %v1088, %v1093
    %v1098 = vrsqrt.pop %v1087
    %v1099 = vmul.f32 %v1098, %v1087
    %v1100 = vmul.f32 %v1099, %v1098
    %v1101 = vmul.f32 0.5, %v1100
    %v1102 = vsub.f32 1.5, %v1101
    %v1103 = vmul.f32 %v1098, %v1102
    %vm1104 = vweird.f32 %v1087
    %vm1105 = vweird.f32 %v1098
    %vm1106 = vmor %vm1104, %vm1105
    %v1107 = vsel %vm1106, %v1098, %v1103
    %v1108 = vmul.f32 %v1074, %v1097
    %v1109 = vmul.f32 %v1075, %v1107
    %v1110 = vperm.slane %v127, 0
    %v1111 = vmul.f32 %v1108, %v1110
    %v1112 = vmul.f32 %v1109, %v1110
    %v1113 = vperm.slane %v128, 0
    %v1114 = vadd.f32 %v1111, %v1113
    %v1115 = vadd.f32 %v1112, %v1113
    %s1116 = scalar_lea.vmem [#allocation2], 128
    %v1117 = vld [vmem:[%s1116] sm:$0xff]
    %v1118 = vld [vmem:[%s1116 + $0x8] sm:$0xff]
    %v1119 = vld [vmem:[%s1116 + $0x10] sm:$0xff]
    %v1120 = vld [vmem:[%s1116 + $0x18] sm:$0xff]
    %v1121 = vld [vmem:[%s1116 + $0x20] sm:$0xff]
    %v1122 = vld [vmem:[%s1116 + $0x28] sm:$0xff]
    %v1123 = vld [vmem:[%s1116 + $0x30] sm:$0xff]
    %v1124 = vld [vmem:[%s1116 + $0x38] sm:$0xff]
    %v1125 = vld [vmem:[%s1116 + $0x40] sm:$0xff]
    %v1126 = vld [vmem:[%s1116 + $0x48] sm:$0xff]
    %v1127 = vld [vmem:[%s1116 + $0x50] sm:$0xff]
    %v1128 = vld [vmem:[%s1116 + $0x58] sm:$0xff]
    %v1129 = vld [vmem:[%s1116 + $0x60] sm:$0xff]
    %v1130 = vld [vmem:[%s1116 + $0x68] sm:$0xff]
    %v1131 = vld [vmem:[%s1116 + $0x70] sm:$0xff]
    %v1132 = vld [vmem:[%s1116 + $0x78] sm:$0xff]
    %v1133 = vld [vmem:[%s4 + $0x8] sm:$0x1]
    %v1134 = vld [vmem:[%s4 + $0x9] sm:$0x1]
    %v1135 = vld [vmem:[%s4 + $0xa] sm:$0x1]
    %v1136 = vld [vmem:[%s4 + $0xb] sm:$0x1]
    %v1137 = vld [vmem:[%s4 + $0xc] sm:$0x1]
    %v1138 = vld [vmem:[%s4 + $0xd] sm:$0x1]
    %v1139 = vld [vmem:[%s4 + $0xe] sm:$0x1]
    %v1140 = vld [vmem:[%s4 + $0xf] sm:$0x1]
    %v1141 = vperm.slane %v1133, 0
    %v1143 = vsel %vm130, %v1114, 0
    %v1146 = vsel %vm130, %v1115, 0
    %1148 = vmatpush.msra.mxu0 0.0
    %1149 = vmatpush.msra.mxu0 0.0
    %1150 = vmatpush.msra.mxu0 0.0
    %1151 = vmatpush.msra.mxu0 0.0
    %1152 = vmatpush.msra.mxu0 0.0
    %1153 = vmatpush.msra.mxu0 0.0
    %1154 = vmatpush.msra.mxu0 0.0
    %1155 = vmatpush.msra.mxu0 0.0
    %1156 = vmatpush.msra.mxu0 0.0
    %1157 = vmatpush.msra.mxu0 0.0
    %1158 = vmatpush.msra.mxu0 0.0
    %1159 = vmatpush.msra.mxu0 0.0
    %1160 = vmatpush.msra.mxu0 %v1120
    %1161 = vmatpush.msra.mxu0 %v1119
    %1162 = vmatpush.msra.mxu0 %v1118
    %1163 = vmatpush.msra.mxu0 %v1117
    %1164 = vmatmul.f32.gmra.mxu0 %v1143
    %v1165 = vpop.f32.mrf.mxu0
    %v1166 = vadd.f32 %v1141, %v1165
    %1167 = vmatmul.f32.gmra.mxu0 %v1146
    %v1168 = vpop.f32.mrf.mxu0
    %v1169 = vadd.f32 %v1141, %v1168
    %1170 = vdwg.mxu0
    %1172 = vrot.lane.b32.xlu0 %v1166, 96
    %v1173 = vpop.permute.xlu0 %1172
    %v1174 = vsel %vm163, %v1166, 0
    %v1176 = vsel %vm163, %v1173, 0
    %1178 = vmatpush.xpose.msra.mxu0 0.0
    %1179 = vmatpush.xpose.msra.mxu0 0.0
    %1180 = vmatpush.xpose.msra.mxu0 0.0
    %1181 = vmatpush.xpose.msra.mxu0 0.0
    %1182 = vmatpush.xpose.msra.mxu0 0.0
    %1183 = vmatpush.xpose.msra.mxu0 0.0
    %1184 = vmatpush.xpose.msra.mxu0 0.0
    %1185 = vmatpush.xpose.msra.mxu0 0.0
    %1186 = vmatpush.xpose.msra.mxu0 0.0
    %1187 = vmatpush.xpose.msra.mxu0 0.0
    %1188 = vmatpush.xpose.msra.mxu0 0.0
    %1189 = vmatpush.xpose.msra.mxu0 0.0
    %1190 = vmatpush.xpose.msra.mxu0 0.0
    %1191 = vmatpush.xpose.msra.mxu0 0.0
    %1192 = vmatpush.xpose.msra.mxu0 0.0
    %1193 = vmatpush.xpose.msra.mxu0 %v1176
    %1194 = vmatmul.f32.gmra.mxu0 %v1174
    %v1195 = vpop.f32.mrf.mxu0
    %v1196 = vadd.f32 0.0, %v1195
    %1197 = vdwg.mxu0
    %1199 = vrot.lane.b32.xlu0 %v1169, 96
    %v1200 = vpop.permute.xlu0 %1199
    %v1201 = vsel %vm163, %v1169, 0
    %v1203 = vsel %vm163, %v1200, 0
    %1205 = vmatpush.xpose.msra.mxu0 0.0
    %1206 = vmatpush.xpose.msra.mxu0 0.0
    %1207 = vmatpush.xpose.msra.mxu0 0.0
    %1208 = vmatpush.xpose.msra.mxu0 0.0
    %1209 = vmatpush.xpose.msra.mxu0 0.0
    %1210 = vmatpush.xpose.msra.mxu0 0.0
    %1211 = vmatpush.xpose.msra.mxu0 0.0
    %1212 = vmatpush.xpose.msra.mxu0 0.0
    %1213 = vmatpush.xpose.msra.mxu0 0.0
    %1214 = vmatpush.xpose.msra.mxu0 0.0
    %1215 = vmatpush.xpose.msra.mxu0 0.0
    %1216 = vmatpush.xpose.msra.mxu0 0.0
    %1217 = vmatpush.xpose.msra.mxu0 0.0
    %1218 = vmatpush.xpose.msra.mxu0 0.0
    %1219 = vmatpush.xpose.msra.mxu0 0.0
    %1220 = vmatpush.xpose.msra.mxu0 %v1203
    %1221 = vmatmul.f32.gmra.mxu0 %v1201
    %v1222 = vpop.f32.mrf.mxu0
    %v1223 = vadd.f32 0.0, %v1222
    %1224 = vdwg.mxu0
    %v1225 = vmul.f32 %v1196, 0.35355338
    %v1226 = vmul.f32 %v1223, 0.35355338
    %v1227 = vadd.f32 %v1225, %v217
    %v1228 = vadd.f32 %v1226, %v218
    %v1229 = vsel %vm163, %v1227, -inf
    %1230 = vmax.xlane.f32.xlu0 %v1229
    %v1231 = vpop.xlane.xlu0 %1230
    %v1232 = vsel %vm163, %v1228, -inf
    %1233 = vmax.xlane.f32.xlu0 %v1232
    %v1234 = vpop.xlane.xlu0 %1233
    %v1235 = vsub.f32 %v1227, %v1231
    %v1236 = vsub.f32 %v1228, %v1234
    %v1237 = vmul.f32 %v1235, 1.442695
    %v1238 = vpow.pop %v1237
    %v1239 = vmul.f32 %v1236, 1.442695
    %v1240 = vpow.pop %v1239
    %v1241 = vsel %vm163, %v1238, 0.0
    %1242 = vadd.xlane.f32.xlu0 %v1241
    %v1243 = vpop.xlane.xlu0 %1242
    %v1244 = vsel %vm163, %v1240, 0.0
    %1245 = vadd.xlane.f32.xlu0 %v1244
    %v1246 = vpop.xlane.xlu0 %1245
    %v1247 = vrcp.pop %v1243
    %v1248 = vmul.f32 %v1243, %v1247
    %v1249 = vsub.f32 1.0, %v1248
    %v1250 = vmul.f32 %v1247, %v1249
    %v1251 = vadd.f32 %v1247, %v1250
    %vm1252 = vweird.f32 %v1243
    %vm1253 = vweird.f32 %v1247
    %vm1254 = vmor %vm1252, %vm1253
    %v1255 = vsel %vm1254, %v1247, %v1251
    %v1256 = vand.u32 2147483647, %v1243
    %vm1257 = vcmp.eq.f32.partialorder %v1256, 8.507059e+37
    %v1258 = vand.u32 %v1243, 2147483648
    %v1259 = vor.u32 1.1754944e-38, %v1258
    %v1260 = vsel %vm1257, %v1259, %v1255
    %v1261 = vrcp.pop %v1246
    %v1262 = vmul.f32 %v1246, %v1261
    %v1263 = vsub.f32 1.0, %v1262
    %v1264 = vmul.f32 %v1261, %v1263
    %v1265 = vadd.f32 %v1261, %v1264
    %vm1266 = vweird.f32 %v1246
    %vm1267 = vweird.f32 %v1261
    %vm1268 = vmor %vm1266, %vm1267
    %v1269 = vsel %vm1268, %v1261, %v1265
    %v1270 = vand.u32 2147483647, %v1246
    %vm1271 = vcmp.eq.f32.partialorder %v1270, 8.507059e+37
    %v1272 = vand.u32 %v1246, 2147483648
    %v1273 = vor.u32 1.1754944e-38, %v1272
    %v1274 = vsel %vm1271, %v1273, %v1269
    %v1275 = vmul.f32 %v1238, %v1260
    %v1276 = vmul.f32 %v1240, %v1274
    %1277 = vrot.lane.b32.xlu0 %v1166, 64
    %v1278 = vpop.permute.xlu0 %1277
    %v1281 = vsel %vm163, %v1275, 0
    %1283 = vmatpush.msra.mxu0 0.0
    %1284 = vmatpush.msra.mxu0 0.0
    %1285 = vmatpush.msra.mxu0 0.0
    %1286 = vmatpush.msra.mxu0 0.0
    %1287 = vmatpush.msra.mxu0 0.0
    %1288 = vmatpush.msra.mxu0 0.0
    %1289 = vmatpush.msra.mxu0 0.0
    %1290 = vmatpush.msra.mxu0 0.0
    %1291 = vmatpush.msra.mxu0 0.0
    %1292 = vmatpush.msra.mxu0 0.0
    %1293 = vmatpush.msra.mxu0 0.0
    %1294 = vmatpush.msra.mxu0 0.0
    %1295 = vmatpush.msra.mxu0 0.0
    %1296 = vmatpush.msra.mxu0 0.0
    %1297 = vmatpush.msra.mxu0 0.0
    %1298 = vmatpush.msra.mxu0 %v1278
    %1299 = vmatmul.f32.gmra.mxu0 %v1281
    %v1300 = vpop.f32.mrf.mxu0
    %v1301 = vadd.f32 0.0, %v1300
    %1302 = vdwg.mxu0
    %1303 = vrot.lane.b32.xlu0 %v1169, 64
    %v1304 = vpop.permute.xlu0 %1303
    %v1307 = vsel %vm163, %v1276, 0
    %1309 = vmatpush.msra.mxu0 0.0
    %1310 = vmatpush.msra.mxu0 0.0
    %1311 = vmatpush.msra.mxu0 0.0
    %1312 = vmatpush.msra.mxu0 0.0
    %1313 = vmatpush.msra.mxu0 0.0
    %1314 = vmatpush.msra.mxu0 0.0
    %1315 = vmatpush.msra.mxu0 0.0
    %1316 = vmatpush.msra.mxu0 0.0
    %1317 = vmatpush.msra.mxu0 0.0
    %1318 = vmatpush.msra.mxu0 0.0
    %1319 = vmatpush.msra.mxu0 0.0
    %1320 = vmatpush.msra.mxu0 0.0
    %1321 = vmatpush.msra.mxu0 0.0
    %1322 = vmatpush.msra.mxu0 0.0
    %1323 = vmatpush.msra.mxu0 0.0
    %1324 = vmatpush.msra.mxu0 %v1304
    %1325 = vmatmul.f32.gmra.mxu0 %v1307
    %v1326 = vpop.f32.mrf.mxu0
    %v1327 = vadd.f32 0.0, %v1326
    %1328 = vdwg.mxu0
    %1329 = vrot.lane.b32.xlu0 %v1166, 120
    %v1330 = vpop.permute.xlu0 %1329
    %1331 = vrot.lane.b32.xlu0 %v1166, 88
    %v1332 = vpop.permute.xlu0 %1331
    %v1333 = vsel %vm163, %v1330, 0
    %v1335 = vsel %vm163, %v1332, 0
    %1337 = vmatpush.xpose.msra.mxu0 0.0
    %1338 = vmatpush.xpose.msra.mxu0 0.0
    %1339 = vmatpush.xpose.msra.mxu0 0.0
    %1340 = vmatpush.xpose.msra.mxu0 0.0
    %1341 = vmatpush.xpose.msra.mxu0 0.0
    %1342 = vmatpush.xpose.msra.mxu0 0.0
    %1343 = vmatpush.xpose.msra.mxu0 0.0
    %1344 = vmatpush.xpose.msra.mxu0 0.0
    %1345 = vmatpush.xpose.msra.mxu0 0.0
    %1346 = vmatpush.xpose.msra.mxu0 0.0
    %1347 = vmatpush.xpose.msra.mxu0 0.0
    %1348 = vmatpush.xpose.msra.mxu0 0.0
    %1349 = vmatpush.xpose.msra.mxu0 0.0
    %1350 = vmatpush.xpose.msra.mxu0 0.0
    %1351 = vmatpush.xpose.msra.mxu0 0.0
    %1352 = vmatpush.xpose.msra.mxu0 %v1335
    %1353 = vmatmul.f32.gmra.mxu0 %v1333
    %v1354 = vpop.f32.mrf.mxu0
    %v1355 = vadd.f32 0.0, %v1354
    %1356 = vdwg.mxu0
    %1357 = vrot.lane.b32.xlu0 %v1169, 120
    %v1358 = vpop.permute.xlu0 %1357
    %1359 = vrot.lane.b32.xlu0 %v1169, 88
    %v1360 = vpop.permute.xlu0 %1359
    %v1361 = vsel %vm163, %v1358, 0
    %v1363 = vsel %vm163, %v1360, 0
    %1365 = vmatpush.xpose.msra.mxu0 0.0
    %1366 = vmatpush.xpose.msra.mxu0 0.0
    %1367 = vmatpush.xpose.msra.mxu0 0.0
    %1368 = vmatpush.xpose.msra.mxu0 0.0
    %1369 = vmatpush.xpose.msra.mxu0 0.0
    %1370 = vmatpush.xpose.msra.mxu0 0.0
    %1371 = vmatpush.xpose.msra.mxu0 0.0
    %1372 = vmatpush.xpose.msra.mxu0 0.0
    %1373 = vmatpush.xpose.msra.mxu0 0.0
    %1374 = vmatpush.xpose.msra.mxu0 0.0
    %1375 = vmatpush.xpose.msra.mxu0 0.0
    %1376 = vmatpush.xpose.msra.mxu0 0.0
    %1377 = vmatpush.xpose.msra.mxu0 0.0
    %1378 = vmatpush.xpose.msra.mxu0 0.0
    %1379 = vmatpush.xpose.msra.mxu0 0.0
    %1380 = vmatpush.xpose.msra.mxu0 %v1363
    %1381 = vmatmul.f32.gmra.mxu0 %v1361
    %v1382 = vpop.f32.mrf.mxu0
    %v1383 = vadd.f32 0.0, %v1382
    %1384 = vdwg.mxu0
    %v1385 = vmul.f32 %v1355, 0.35355338
    %v1386 = vmul.f32 %v1383, 0.35355338
    %v1387 = vadd.f32 %v1385, %v217
    %v1388 = vadd.f32 %v1386, %v218
    %v1389 = vsel %vm163, %v1387, -inf
    %1390 = vmax.xlane.f32.xlu0 %v1389
    %v1391 = vpop.xlane.xlu0 %1390
    %v1392 = vsel %vm163, %v1388, -inf
    %1393 = vmax.xlane.f32.xlu0 %v1392
    %v1394 = vpop.xlane.xlu0 %1393
    %v1395 = vsub.f32 %v1387, %v1391
    %v1396 = vsub.f32 %v1388, %v1394
    %v1397 = vmul.f32 %v1395, 1.442695
    %v1398 = vpow.pop %v1397
    %v1399 = vmul.f32 %v1396, 1.442695
    %v1400 = vpow.pop %v1399
    %v1401 = vsel %vm163, %v1398, 0.0
    %1402 = vadd.xlane.f32.xlu0 %v1401
    %v1403 = vpop.xlane.xlu0 %1402
    %v1404 = vsel %vm163, %v1400, 0.0
    %1405 = vadd.xlane.f32.xlu0 %v1404
    %v1406 = vpop.xlane.xlu0 %1405
    %v1407 = vrcp.pop %v1403
    %v1408 = vmul.f32 %v1403, %v1407
    %v1409 = vsub.f32 1.0, %v1408
    %v1410 = vmul.f32 %v1407, %v1409
    %v1411 = vadd.f32 %v1407, %v1410
    %vm1412 = vweird.f32 %v1403
    %vm1413 = vweird.f32 %v1407
    %vm1414 = vmor %vm1412, %vm1413
    %v1415 = vsel %vm1414, %v1407, %v1411
    %v1416 = vand.u32 2147483647, %v1403
    %vm1417 = vcmp.eq.f32.partialorder %v1416, 8.507059e+37
    %v1418 = vand.u32 %v1403, 2147483648
    %v1419 = vor.u32 1.1754944e-38, %v1418
    %v1420 = vsel %vm1417, %v1419, %v1415
    %v1421 = vrcp.pop %v1406
    %v1422 = vmul.f32 %v1406, %v1421
    %v1423 = vsub.f32 1.0, %v1422
    %v1424 = vmul.f32 %v1421, %v1423
    %v1425 = vadd.f32 %v1421, %v1424
    %vm1426 = vweird.f32 %v1406
    %vm1427 = vweird.f32 %v1421
    %vm1428 = vmor %vm1426, %vm1427
    %v1429 = vsel %vm1428, %v1421, %v1425
    %v1430 = vand.u32 2147483647, %v1406
    %vm1431 = vcmp.eq.f32.partialorder %v1430, 8.507059e+37
    %v1432 = vand.u32 %v1406, 2147483648
    %v1433 = vor.u32 1.1754944e-38, %v1432
    %v1434 = vsel %vm1431, %v1433, %v1429
    %v1435 = vmul.f32 %v1398, %v1420
    %v1436 = vmul.f32 %v1400, %v1434
    %1437 = vrot.lane.b32.xlu0 %v1166, 56
    %v1438 = vpop.permute.xlu0 %1437
    %v1441 = vsel %vm163, %v1435, 0
    %1443 = vmatpush.msra.mxu0 0.0
    %1444 = vmatpush.msra.mxu0 0.0
    %1445 = vmatpush.msra.mxu0 0.0
    %1446 = vmatpush.msra.mxu0 0.0
    %1447 = vmatpush.msra.mxu0 0.0
    %1448 = vmatpush.msra.mxu0 0.0
    %1449 = vmatpush.msra.mxu0 0.0
    %1450 = vmatpush.msra.mxu0 0.0
    %1451 = vmatpush.msra.mxu0 0.0
    %1452 = vmatpush.msra.mxu0 0.0
    %1453 = vmatpush.msra.mxu0 0.0
    %1454 = vmatpush.msra.mxu0 0.0
    %1455 = vmatpush.msra.mxu0 0.0
    %1456 = vmatpush.msra.mxu0 0.0
    %1457 = vmatpush.msra.mxu0 0.0
    %1458 = vmatpush.msra.mxu0 %v1438
    %1459 = vmatmul.f32.gmra.mxu0 %v1441
    %v1460 = vpop.f32.mrf.mxu0
    %v1461 = vadd.f32 0.0, %v1460
    %1462 = vdwg.mxu0
    %1463 = vrot.lane.b32.xlu0 %v1169, 56
    %v1464 = vpop.permute.xlu0 %1463
    %v1467 = vsel %vm163, %v1436, 0
    %1469 = vmatpush.msra.mxu0 0.0
    %1470 = vmatpush.msra.mxu0 0.0
    %1471 = vmatpush.msra.mxu0 0.0
    %1472 = vmatpush.msra.mxu0 0.0
    %1473 = vmatpush.msra.mxu0 0.0
    %1474 = vmatpush.msra.mxu0 0.0
    %1475 = vmatpush.msra.mxu0 0.0
    %1476 = vmatpush.msra.mxu0 0.0
    %1477 = vmatpush.msra.mxu0 0.0
    %1478 = vmatpush.msra.mxu0 0.0
    %1479 = vmatpush.msra.mxu0 0.0
    %1480 = vmatpush.msra.mxu0 0.0
    %1481 = vmatpush.msra.mxu0 0.0
    %1482 = vmatpush.msra.mxu0 0.0
    %1483 = vmatpush.msra.mxu0 0.0
    %1484 = vmatpush.msra.mxu0 %v1464
    %1485 = vmatmul.f32.gmra.mxu0 %v1467
    %v1486 = vpop.f32.mrf.mxu0
    %v1487 = vadd.f32 0.0, %v1486
    %1488 = vdwg.mxu0
    %1490 = vrot.lane.b32.xlu0 %v1118, 32
    %v1491 = vpop.permute.xlu0 %1490
    %v1494 = vsel %vm163, %v1461, 0
    %v1497 = vsel %vm163, %v1487, 0
    %1499 = vmatpush.msra.mxu0 0.0
    %1500 = vmatpush.msra.mxu0 0.0
    %1501 = vmatpush.msra.mxu0 0.0
    %1502 = vmatpush.msra.mxu0 0.0
    %1503 = vmatpush.msra.mxu0 0.0
    %1504 = vmatpush.msra.mxu0 0.0
    %1505 = vmatpush.msra.mxu0 0.0
    %1506 = vmatpush.msra.mxu0 0.0
    %1507 = vmatpush.msra.mxu0 0.0
    %1508 = vmatpush.msra.mxu0 0.0
    %1509 = vmatpush.msra.mxu0 0.0
    %1510 = vmatpush.msra.mxu0 0.0
    %1511 = vmatpush.msra.mxu0 0.0
    %1512 = vmatpush.msra.mxu0 0.0
    %1513 = vmatpush.msra.mxu0 0.0
    %1514 = vmatpush.msra.mxu0 %v1491
    %1515 = vmatmul.f32.gmra.mxu0 %v1494
    %v1516 = vpop.f32.mrf.mxu0
    %v1517 = vadd.f32 0.0, %v1516
    %1518 = vmatmul.f32.gmra.mxu0 %v1497
    %v1519 = vpop.f32.mrf.mxu0
    %v1520 = vadd.f32 0.0, %v1519
    %1521 = vdwg.mxu0
    %1523 = vrot.lane.b32.xlu0 %v1117, 32
    %v1524 = vpop.permute.xlu0 %1523
    %v1527 = vsel %vm163, %v1301, 0
    %v1530 = vsel %vm163, %v1327, 0
    %1532 = vmatpush.msra.mxu0 0.0
    %1533 = vmatpush.msra.mxu0 0.0
    %1534 = vmatpush.msra.mxu0 0.0
    %1535 = vmatpush.msra.mxu0 0.0
    %1536 = vmatpush.msra.mxu0 0.0
    %1537 = vmatpush.msra.mxu0 0.0
    %1538 = vmatpush.msra.mxu0 0.0
    %1539 = vmatpush.msra.mxu0 0.0
    %1540 = vmatpush.msra.mxu0 0.0
    %1541 = vmatpush.msra.mxu0 0.0
    %1542 = vmatpush.msra.mxu0 0.0
    %1543 = vmatpush.msra.mxu0 0.0
    %1544 = vmatpush.msra.mxu0 0.0
    %1545 = vmatpush.msra.mxu0 0.0
    %1546 = vmatpush.msra.mxu0 0.0
    %1547 = vmatpush.msra.mxu0 %v1524
    %1548 = vmatmul.f32.gmra.mxu0 %v1527
    %v1549 = vpop.f32.mrf.mxu0
    %v1550 = vadd.f32 %v1517, %v1549
    %1551 = vmatmul.f32.gmra.mxu0 %v1530
    %v1552 = vpop.f32.mrf.mxu0
    %v1553 = vadd.f32 %v1520, %v1552
    %1554 = vdwg.mxu0
    %1555 = vrot.lane.b32.xlu0 %v1166, 112
    %v1556 = vpop.permute.xlu0 %1555
    %1557 = vrot.lane.b32.xlu0 %v1166, 80
    %v1558 = vpop.permute.xlu0 %1557
    %v1559 = vsel %vm163, %v1556, 0
    %v1561 = vsel %vm163, %v1558, 0
    %1563 = vmatpush.xpose.msra.mxu0 0.0
    %1564 = vmatpush.xpose.msra.mxu0 0.0
    %1565 = vmatpush.xpose.msra.mxu0 0.0
    %1566 = vmatpush.xpose.msra.mxu0 0.0
    %1567 = vmatpush.xpose.msra.mxu0 0.0
    %1568 = vmatpush.xpose.msra.mxu0 0.0
    %1569 = vmatpush.xpose.msra.mxu0 0.0
    %1570 = vmatpush.xpose.msra.mxu0 0.0
    %1571 = vmatpush.xpose.msra.mxu0 0.0
    %1572 = vmatpush.xpose.msra.mxu0 0.0
    %1573 = vmatpush.xpose.msra.mxu0 0.0
    %1574 = vmatpush.xpose.msra.mxu0 0.0
    %1575 = vmatpush.xpose.msra.mxu0 0.0
    %1576 = vmatpush.xpose.msra.mxu0 0.0
    %1577 = vmatpush.xpose.msra.mxu0 0.0
    %1578 = vmatpush.xpose.msra.mxu0 %v1561
    %1579 = vmatmul.f32.gmra.mxu0 %v1559
    %v1580 = vpop.f32.mrf.mxu0
    %v1581 = vadd.f32 0.0, %v1580
    %1582 = vdwg.mxu0
    %1583 = vrot.lane.b32.xlu0 %v1169, 112
    %v1584 = vpop.permute.xlu0 %1583
    %1585 = vrot.lane.b32.xlu0 %v1169, 80
    %v1586 = vpop.permute.xlu0 %1585
    %v1587 = vsel %vm163, %v1584, 0
    %v1589 = vsel %vm163, %v1586, 0
    %1591 = vmatpush.xpose.msra.mxu0 0.0
    %1592 = vmatpush.xpose.msra.mxu0 0.0
    %1593 = vmatpush.xpose.msra.mxu0 0.0
    %1594 = vmatpush.xpose.msra.mxu0 0.0
    %1595 = vmatpush.xpose.msra.mxu0 0.0
    %1596 = vmatpush.xpose.msra.mxu0 0.0
    %1597 = vmatpush.xpose.msra.mxu0 0.0
    %1598 = vmatpush.xpose.msra.mxu0 0.0
    %1599 = vmatpush.xpose.msra.mxu0 0.0
    %1600 = vmatpush.xpose.msra.mxu0 0.0
    %1601 = vmatpush.xpose.msra.mxu0 0.0
    %1602 = vmatpush.xpose.msra.mxu0 0.0
    %1603 = vmatpush.xpose.msra.mxu0 0.0
    %1604 = vmatpush.xpose.msra.mxu0 0.0
    %1605 = vmatpush.xpose.msra.mxu0 0.0
    %1606 = vmatpush.xpose.msra.mxu0 %v1589
    %1607 = vmatmul.f32.gmra.mxu0 %v1587
    %v1608 = vpop.f32.mrf.mxu0
    %v1609 = vadd.f32 0.0, %v1608
    %1610 = vdwg.mxu0
    %v1611 = vmul.f32 %v1581, 0.35355338
    %v1612 = vmul.f32 %v1609, 0.35355338
    %v1613 = vadd.f32 %v1611, %v217
    %v1614 = vadd.f32 %v1612, %v218
    %v1615 = vsel %vm163, %v1613, -inf
    %1616 = vmax.xlane.f32.xlu0 %v1615
    %v1617 = vpop.xlane.xlu0 %1616
    %v1618 = vsel %vm163, %v1614, -inf
    %1619 = vmax.xlane.f32.xlu0 %v1618
    %v1620 = vpop.xlane.xlu0 %1619
    %v1621 = vsub.f32 %v1613, %v1617
    %v1622 = vsub.f32 %v1614, %v1620
    %v1623 = vmul.f32 %v1621, 1.442695
    %v1624 = vpow.pop %v1623
    %v1625 = vmul.f32 %v1622, 1.442695
    %v1626 = vpow.pop %v1625
    %v1627 = vsel %vm163, %v1624, 0.0
    %1628 = vadd.xlane.f32.xlu0 %v1627
    %v1629 = vpop.xlane.xlu0 %1628
    %v1630 = vsel %vm163, %v1626, 0.0
    %1631 = vadd.xlane.f32.xlu0 %v1630
    %v1632 = vpop.xlane.xlu0 %1631
    %v1633 = vrcp.pop %v1629
    %v1634 = vmul.f32 %v1629, %v1633
    %v1635 = vsub.f32 1.0, %v1634
    %v1636 = vmul.f32 %v1633, %v1635
    %v1637 = vadd.f32 %v1633, %v1636
    %vm1638 = vweird.f32 %v1629
    %vm1639 = vweird.f32 %v1633
    %vm1640 = vmor %vm1638, %vm1639
    %v1641 = vsel %vm1640, %v1633, %v1637
    %v1642 = vand.u32 2147483647, %v1629
    %vm1643 = vcmp.eq.f32.partialorder %v1642, 8.507059e+37
    %v1644 = vand.u32 %v1629, 2147483648
    %v1645 = vor.u32 1.1754944e-38, %v1644
    %v1646 = vsel %vm1643, %v1645, %v1641
    %v1647 = vrcp.pop %v1632
    %v1648 = vmul.f32 %v1632, %v1647
    %v1649 = vsub.f32 1.0, %v1648
    %v1650 = vmul.f32 %v1647, %v1649
    %v1651 = vadd.f32 %v1647, %v1650
    %vm1652 = vweird.f32 %v1632
    %vm1653 = vweird.f32 %v1647
    %vm1654 = vmor %vm1652, %vm1653
    %v1655 = vsel %vm1654, %v1647, %v1651
    %v1656 = vand.u32 2147483647, %v1632
    %vm1657 = vcmp.eq.f32.partialorder %v1656, 8.507059e+37
    %v1658 = vand.u32 %v1632, 2147483648
    %v1659 = vor.u32 1.1754944e-38, %v1658
    %v1660 = vsel %vm1657, %v1659, %v1655
    %v1661 = vmul.f32 %v1624, %v1646
    %v1662 = vmul.f32 %v1626, %v1660
    %1663 = vrot.lane.b32.xlu0 %v1166, 48
    %v1664 = vpop.permute.xlu0 %1663
    %v1667 = vsel %vm163, %v1661, 0
    %1669 = vmatpush.msra.mxu0 0.0
    %1670 = vmatpush.msra.mxu0 0.0
    %1671 = vmatpush.msra.mxu0 0.0
    %1672 = vmatpush.msra.mxu0 0.0
    %1673 = vmatpush.msra.mxu0 0.0
    %1674 = vmatpush.msra.mxu0 0.0
    %1675 = vmatpush.msra.mxu0 0.0
    %1676 = vmatpush.msra.mxu0 0.0
    %1677 = vmatpush.msra.mxu0 0.0
    %1678 = vmatpush.msra.mxu0 0.0
    %1679 = vmatpush.msra.mxu0 0.0
    %1680 = vmatpush.msra.mxu0 0.0
    %1681 = vmatpush.msra.mxu0 0.0
    %1682 = vmatpush.msra.mxu0 0.0
    %1683 = vmatpush.msra.mxu0 0.0
    %1684 = vmatpush.msra.mxu0 %v1664
    %1685 = vmatmul.f32.gmra.mxu0 %v1667
    %v1686 = vpop.f32.mrf.mxu0
    %v1687 = vadd.f32 0.0, %v1686
    %1688 = vdwg.mxu0
    %1689 = vrot.lane.b32.xlu0 %v1169, 48
    %v1690 = vpop.permute.xlu0 %1689
    %v1693 = vsel %vm163, %v1662, 0
    %1695 = vmatpush.msra.mxu0 0.0
    %1696 = vmatpush.msra.mxu0 0.0
    %1697 = vmatpush.msra.mxu0 0.0
    %1698 = vmatpush.msra.mxu0 0.0
    %1699 = vmatpush.msra.mxu0 0.0
    %1700 = vmatpush.msra.mxu0 0.0
    %1701 = vmatpush.msra.mxu0 0.0
    %1702 = vmatpush.msra.mxu0 0.0
    %1703 = vmatpush.msra.mxu0 0.0
    %1704 = vmatpush.msra.mxu0 0.0
    %1705 = vmatpush.msra.mxu0 0.0
    %1706 = vmatpush.msra.mxu0 0.0
    %1707 = vmatpush.msra.mxu0 0.0
    %1708 = vmatpush.msra.mxu0 0.0
    %1709 = vmatpush.msra.mxu0 0.0
    %1710 = vmatpush.msra.mxu0 %v1690
    %1711 = vmatmul.f32.gmra.mxu0 %v1693
    %v1712 = vpop.f32.mrf.mxu0
    %v1713 = vadd.f32 0.0, %v1712
    %1714 = vdwg.mxu0
    %1716 = vrot.lane.b32.xlu0 %v1119, 32
    %v1717 = vpop.permute.xlu0 %1716
    %v1720 = vsel %vm163, %v1687, 0
    %v1723 = vsel %vm163, %v1713, 0
    %1725 = vmatpush.msra.mxu0 0.0
    %1726 = vmatpush.msra.mxu0 0.0
    %1727 = vmatpush.msra.mxu0 0.0
    %1728 = vmatpush.msra.mxu0 0.0
    %1729 = vmatpush.msra.mxu0 0.0
    %1730 = vmatpush.msra.mxu0 0.0
    %1731 = vmatpush.msra.mxu0 0.0
    %1732 = vmatpush.msra.mxu0 0.0
    %1733 = vmatpush.msra.mxu0 0.0
    %1734 = vmatpush.msra.mxu0 0.0
    %1735 = vmatpush.msra.mxu0 0.0
    %1736 = vmatpush.msra.mxu0 0.0
    %1737 = vmatpush.msra.mxu0 0.0
    %1738 = vmatpush.msra.mxu0 0.0
    %1739 = vmatpush.msra.mxu0 0.0
    %1740 = vmatpush.msra.mxu0 %v1717
    %1741 = vmatmul.f32.gmra.mxu0 %v1720
    %v1742 = vpop.f32.mrf.mxu0
    %v1743 = vadd.f32 0.0, %v1742
    %1744 = vmatmul.f32.gmra.mxu0 %v1723
    %v1745 = vpop.f32.mrf.mxu0
    %v1746 = vadd.f32 0.0, %v1745
    %1747 = vdwg.mxu0
    %v1748 = vadd.f32 %v1550, %v1743
    %v1749 = vadd.f32 %v1553, %v1746
    %1750 = vrot.lane.b32.xlu0 %v1166, 104
    %v1751 = vpop.permute.xlu0 %1750
    %1752 = vrot.lane.b32.xlu0 %v1166, 72
    %v1753 = vpop.permute.xlu0 %1752
    %v1754 = vsel %vm163, %v1751, 0
    %v1756 = vsel %vm163, %v1753, 0
    %1758 = vmatpush.xpose.msra.mxu0 0.0
    %1759 = vmatpush.xpose.msra.mxu0 0.0
    %1760 = vmatpush.xpose.msra.mxu0 0.0
    %1761 = vmatpush.xpose.msra.mxu0 0.0
    %1762 = vmatpush.xpose.msra.mxu0 0.0
    %1763 = vmatpush.xpose.msra.mxu0 0.0
    %1764 = vmatpush.xpose.msra.mxu0 0.0
    %1765 = vmatpush.xpose.msra.mxu0 0.0
    %1766 = vmatpush.xpose.msra.mxu0 0.0
    %1767 = vmatpush.xpose.msra.mxu0 0.0
    %1768 = vmatpush.xpose.msra.mxu0 0.0
    %1769 = vmatpush.xpose.msra.mxu0 0.0
    %1770 = vmatpush.xpose.msra.mxu0 0.0
    %1771 = vmatpush.xpose.msra.mxu0 0.0
    %1772 = vmatpush.xpose.msra.mxu0 0.0
    %1773 = vmatpush.xpose.msra.mxu0 %v1756
    %1774 = vmatmul.f32.gmra.mxu0 %v1754
    %v1775 = vpop.f32.mrf.mxu0
    %v1776 = vadd.f32 0.0, %v1775
    %1777 = vdwg.mxu0
    %1778 = vrot.lane.b32.xlu0 %v1169, 104
    %v1779 = vpop.permute.xlu0 %1778
    %1780 = vrot.lane.b32.xlu0 %v1169, 72
    %v1781 = vpop.permute.xlu0 %1780
    %v1782 = vsel %vm163, %v1779, 0
    %v1784 = vsel %vm163, %v1781, 0
    %1786 = vmatpush.xpose.msra.mxu0 0.0
    %1787 = vmatpush.xpose.msra.mxu0 0.0
    %1788 = vmatpush.xpose.msra.mxu0 0.0
    %1789 = vmatpush.xpose.msra.mxu0 0.0
    %1790 = vmatpush.xpose.msra.mxu0 0.0
    %1791 = vmatpush.xpose.msra.mxu0 0.0
    %1792 = vmatpush.xpose.msra.mxu0 0.0
    %1793 = vmatpush.xpose.msra.mxu0 0.0
    %1794 = vmatpush.xpose.msra.mxu0 0.0
    %1795 = vmatpush.xpose.msra.mxu0 0.0
    %1796 = vmatpush.xpose.msra.mxu0 0.0
    %1797 = vmatpush.xpose.msra.mxu0 0.0
    %1798 = vmatpush.xpose.msra.mxu0 0.0
    %1799 = vmatpush.xpose.msra.mxu0 0.0
    %1800 = vmatpush.xpose.msra.mxu0 0.0
    %1801 = vmatpush.xpose.msra.mxu0 %v1784
    %1802 = vmatmul.f32.gmra.mxu0 %v1782
    %v1803 = vpop.f32.mrf.mxu0
    %v1804 = vadd.f32 0.0, %v1803
    %1805 = vdwg.mxu0
    %v1806 = vmul.f32 %v1776, 0.35355338
    %v1807 = vmul.f32 %v1804, 0.35355338
    %v1808 = vadd.f32 %v1806, %v217
    %v1809 = vadd.f32 %v1807, %v218
    %v1810 = vsel %vm163, %v1808, -inf
    %1811 = vmax.xlane.f32.xlu0 %v1810
    %v1812 = vpop.xlane.xlu0 %1811
    %v1813 = vsel %vm163, %v1809, -inf
    %1814 = vmax.xlane.f32.xlu0 %v1813
    %v1815 = vpop.xlane.xlu0 %1814
    %v1816 = vsub.f32 %v1808, %v1812
    %v1817 = vsub.f32 %v1809, %v1815
    %v1818 = vmul.f32 %v1816, 1.442695
    %v1819 = vpow.pop %v1818
    %v1820 = vmul.f32 %v1817, 1.442695
    %v1821 = vpow.pop %v1820
    %v1822 = vsel %vm163, %v1819, 0.0
    %1823 = vadd.xlane.f32.xlu0 %v1822
    %v1824 = vpop.xlane.xlu0 %1823
    %v1825 = vsel %vm163, %v1821, 0.0
    %1826 = vadd.xlane.f32.xlu0 %v1825
    %v1827 = vpop.xlane.xlu0 %1826
    %v1828 = vrcp.pop %v1824
    %v1829 = vmul.f32 %v1824, %v1828
    %v1830 = vsub.f32 1.0, %v1829
    %v1831 = vmul.f32 %v1828, %v1830
    %v1832 = vadd.f32 %v1828, %v1831
    %vm1833 = vweird.f32 %v1824
    %vm1834 = vweird.f32 %v1828
    %vm1835 = vmor %vm1833, %vm1834
    %v1836 = vsel %vm1835, %v1828, %v1832
    %v1837 = vand.u32 2147483647, %v1824
    %vm1838 = vcmp.eq.f32.partialorder %v1837, 8.507059e+37
    %v1839 = vand.u32 %v1824, 2147483648
    %v1840 = vor.u32 1.1754944e-38, %v1839
    %v1841 = vsel %vm1838, %v1840, %v1836
    %v1842 = vrcp.pop %v1827
    %v1843 = vmul.f32 %v1827, %v1842
    %v1844 = vsub.f32 1.0, %v1843
    %v1845 = vmul.f32 %v1842, %v1844
    %v1846 = vadd.f32 %v1842, %v1845
    %vm1847 = vweird.f32 %v1827
    %vm1848 = vweird.f32 %v1842
    %vm1849 = vmor %vm1847, %vm1848
    %v1850 = vsel %vm1849, %v1842, %v1846
    %v1851 = vand.u32 2147483647, %v1827
    %vm1852 = vcmp.eq.f32.partialorder %v1851, 8.507059e+37
    %v1853 = vand.u32 %v1827, 2147483648
    %v1854 = vor.u32 1.1754944e-38, %v1853
    %v1855 = vsel %vm1852, %v1854, %v1850
    %v1856 = vmul.f32 %v1819, %v1841
    %v1857 = vmul.f32 %v1821, %v1855
    %1858 = vrot.lane.b32.xlu0 %v1166, 40
    %v1859 = vpop.permute.xlu0 %1858
    %v1862 = vsel %vm163, %v1856, 0
    %1864 = vmatpush.msra.mxu0 0.0
    %1865 = vmatpush.msra.mxu0 0.0
    %1866 = vmatpush.msra.mxu0 0.0
    %1867 = vmatpush.msra.mxu0 0.0
    %1868 = vmatpush.msra.mxu0 0.0
    %1869 = vmatpush.msra.mxu0 0.0
    %1870 = vmatpush.msra.mxu0 0.0
    %1871 = vmatpush.msra.mxu0 0.0
    %1872 = vmatpush.msra.mxu0 0.0
    %1873 = vmatpush.msra.mxu0 0.0
    %1874 = vmatpush.msra.mxu0 0.0
    %1875 = vmatpush.msra.mxu0 0.0
    %1876 = vmatpush.msra.mxu0 0.0
    %1877 = vmatpush.msra.mxu0 0.0
    %1878 = vmatpush.msra.mxu0 0.0
    %1879 = vmatpush.msra.mxu0 %v1859
    %1880 = vmatmul.f32.gmra.mxu0 %v1862
    %v1881 = vpop.f32.mrf.mxu0
    %v1882 = vadd.f32 0.0, %v1881
    %1883 = vdwg.mxu0
    %1884 = vrot.lane.b32.xlu0 %v1169, 40
    %v1885 = vpop.permute.xlu0 %1884
    %v1888 = vsel %vm163, %v1857, 0
    %1890 = vmatpush.msra.mxu0 0.0
    %1891 = vmatpush.msra.mxu0 0.0
    %1892 = vmatpush.msra.mxu0 0.0
    %1893 = vmatpush.msra.mxu0 0.0
    %1894 = vmatpush.msra.mxu0 0.0
    %1895 = vmatpush.msra.mxu0 0.0
    %1896 = vmatpush.msra.mxu0 0.0
    %1897 = vmatpush.msra.mxu0 0.0
    %1898 = vmatpush.msra.mxu0 0.0
    %1899 = vmatpush.msra.mxu0 0.0
    %1900 = vmatpush.msra.mxu0 0.0
    %1901 = vmatpush.msra.mxu0 0.0
    %1902 = vmatpush.msra.mxu0 0.0
    %1903 = vmatpush.msra.mxu0 0.0
    %1904 = vmatpush.msra.mxu0 0.0
    %1905 = vmatpush.msra.mxu0 %v1885
    %1906 = vmatmul.f32.gmra.mxu0 %v1888
    %v1907 = vpop.f32.mrf.mxu0
    %v1908 = vadd.f32 0.0, %v1907
    %1909 = vdwg.mxu0
    %1911 = vrot.lane.b32.xlu0 %v1120, 32
    %v1912 = vpop.permute.xlu0 %1911
    %v1915 = vsel %vm163, %v1882, 0
    %v1918 = vsel %vm163, %v1908, 0
    %1920 = vmatpush.msra.mxu0 0.0
    %1921 = vmatpush.msra.mxu0 0.0
    %1922 = vmatpush.msra.mxu0 0.0
    %1923 = vmatpush.msra.mxu0 0.0
    %1924 = vmatpush.msra.mxu0 0.0
    %1925 = vmatpush.msra.mxu0 0.0
    %1926 = vmatpush.msra.mxu0 0.0
    %1927 = vmatpush.msra.mxu0 0.0
    %1928 = vmatpush.msra.mxu0 0.0
    %1929 = vmatpush.msra.mxu0 0.0
    %1930 = vmatpush.msra.mxu0 0.0
    %1931 = vmatpush.msra.mxu0 0.0
    %1932 = vmatpush.msra.mxu0 0.0
    %1933 = vmatpush.msra.mxu0 0.0
    %1934 = vmatpush.msra.mxu0 0.0
    %1935 = vmatpush.msra.mxu0 %v1912
    %1936 = vmatmul.f32.gmra.mxu0 %v1915
    %v1937 = vpop.f32.mrf.mxu0
    %v1938 = vadd.f32 0.0, %v1937
    %1939 = vmatmul.f32.gmra.mxu0 %v1918
    %v1940 = vpop.f32.mrf.mxu0
    %v1941 = vadd.f32 0.0, %v1940
    %1942 = vdwg.mxu0
    %v1943 = vadd.f32 %v1748, %v1938
    %v1944 = vadd.f32 %v1749, %v1941
    %v1945 = vperm.slane %v1135, 0
    %v1946 = vadd.f32 %v1943, %v1945
    %v1947 = vadd.f32 %v1944, %v1945
    %v1948 = vadd.f32 %v1114, %v1946
    %v1949 = vadd.f32 %v1115, %v1947
    %v1950 = vsel %vm130, %v1948, 0.0
    %1951 = vadd.xlane.f32.xlu0 %v1950
    %v1952 = vpop.xlane.xlu0 %1951
    %v1953 = vsel %vm130, %v1949, 0.0
    %1954 = vadd.xlane.f32.xlu0 %v1953
    %v1955 = vpop.xlane.xlu0 %1954
    %v1956 = vmul.f32 %v1952, %v956
    %v1957 = vmul.f32 %v1955, %v956
    %v1958 = vsub.f32 %v1948, %v1956
    %v1959 = vsub.f32 %v1949, %v1957
    %v1960 = vmul.f32 %v1958, %v1958
    %v1961 = vmul.f32 %v1959, %v1959
    %v1962 = vsel %vm130, %v1960, 0.0
    %1963 = vadd.xlane.f32.xlu0 %v1962
    %v1964 = vpop.xlane.xlu0 %1963
    %v1965 = vsel %vm130, %v1961, 0.0
    %1966 = vadd.xlane.f32.xlu0 %v1965
    %v1967 = vpop.xlane.xlu0 %1966
    %v1968 = vmul.f32 %v1964, %v956
    %v1969 = vmul.f32 %v1967, %v956
    %v1970 = vadd.f32 %v1968, 1e-05
    %v1971 = vadd.f32 %v1969, 1e-05
    %v1972 = vrsqrt.pop %v1970
    %v1973 = vmul.f32 %v1972, %v1970
    %v1974 = vmul.f32 %v1973, %v1972
    %v1975 = vmul.f32 0.5, %v1974
    %v1976 = vsub.f32 1.5, %v1975
    %v1977 = vmul.f32 %v1972, %v1976
    %vm1978 = vweird.f32 %v1970
    %vm1979 = vweird.f32 %v1972
    %vm1980 = vmor %vm1978, %vm1979
    %v1981 = vsel %vm1980, %v1972, %v1977
    %v1982 = vrsqrt.pop %v1971
    %v1983 = vmul.f32 %v1982, %v1971
    %v1984 = vmul.f32 %v1983, %v1982
    %v1985 = vmul.f32 0.5, %v1984
    %v1986 = vsub.f32 1.5, %v1985
    %v1987 = vmul.f32 %v1982, %v1986
    %vm1988 = vweird.f32 %v1971
    %vm1989 = vweird.f32 %v1982
    %vm1990 = vmor %vm1988, %vm1989
    %v1991 = vsel %vm1990, %v1982, %v1987
    %v1992 = vmul.f32 %v1958, %v1981
    %v1993 = vmul.f32 %v1959, %v1991
    %v1994 = vperm.slane %v1137, 0
    %v1995 = vmul.f32 %v1992, %v1994
    %v1996 = vmul.f32 %v1993, %v1994
    %v1997 = vperm.slane %v1138, 0
    %v1998 = vadd.f32 %v1995, %v1997
    %v1999 = vadd.f32 %v1996, %v1997
    %v2000 = vperm.slane %v1134, 0
    %v2002 = vsel %vm130, %v1998, 0
    %v2005 = vsel %vm130, %v1999, 0
    %2007 = vmatpush.msra.mxu0 0.0
    %2008 = vmatpush.msra.mxu0 0.0
    %2009 = vmatpush.msra.mxu0 0.0
    %2010 = vmatpush.msra.mxu0 0.0
    %2011 = vmatpush.msra.mxu0 0.0
    %2012 = vmatpush.msra.mxu0 0.0
    %2013 = vmatpush.msra.mxu0 0.0
    %2014 = vmatpush.msra.mxu0 0.0
    %2015 = vmatpush.msra.mxu0 0.0
    %2016 = vmatpush.msra.mxu0 0.0
    %2017 = vmatpush.msra.mxu0 0.0
    %2018 = vmatpush.msra.mxu0 0.0
    %2019 = vmatpush.msra.mxu0 %v1124
    %2020 = vmatpush.msra.mxu0 %v1123
    %2021 = vmatpush.msra.mxu0 %v1122
    %2022 = vmatpush.msra.mxu0 %v1121
    %2023 = vmatmul.f32.gmra.mxu0 %v2002
    %v2024 = vpop.f32.mrf.mxu0
    %v2025 = vadd.f32 %v2000, %v2024
    %2026 = vmatmul.f32.gmra.mxu0 %v2005
    %v2027 = vpop.f32.mrf.mxu0
    %v2028 = vadd.f32 %v2000, %v2027
    %2029 = vdwg.mxu0
    %v2030 = vmax.f32 %v2025, 0.0
    %v2031 = vmax.f32 %v2028, 0.0
    %v2032 = vperm.slane %v1136, 0
    %v2034 = vsel %vm1034, %v2030, 0
    %v2037 = vsel %vm1034, %v2031, 0
    %2039 = vmatpush.msra.mxu0 0.0
    %2040 = vmatpush.msra.mxu0 0.0
    %2041 = vmatpush.msra.mxu0 0.0
    %2042 = vmatpush.msra.mxu0 0.0
    %2043 = vmatpush.msra.mxu0 0.0
    %2044 = vmatpush.msra.mxu0 0.0
    %2045 = vmatpush.msra.mxu0 0.0
    %2046 = vmatpush.msra.mxu0 0.0
    %2047 = vmatpush.msra.mxu0 %v1132
    %2048 = vmatpush.msra.mxu0 %v1131
    %2049 = vmatpush.msra.mxu0 %v1130
    %2050 = vmatpush.msra.mxu0 %v1129
    %2051 = vmatpush.msra.mxu0 %v1128
    %2052 = vmatpush.msra.mxu0 %v1127
    %2053 = vmatpush.msra.mxu0 %v1126
    %2054 = vmatpush.msra.mxu0 %v1125
    %2055 = vmatmul.f32.gmra.mxu0 %v2034
    %v2056 = vpop.f32.mrf.mxu0
    %v2057 = vadd.f32 %v2032, %v2056
    %2058 = vmatmul.f32.gmra.mxu0 %v2037
    %v2059 = vpop.f32.mrf.mxu0
    %v2060 = vadd.f32 %v2032, %v2059
    %2061 = vdwg.mxu0
    %v2062 = vadd.f32 %v1998, %v2057
    %v2063 = vadd.f32 %v1999, %v2060
    %v2064 = vsel %vm130, %v2062, 0.0
    %2065 = vadd.xlane.f32.xlu0 %v2064
    %v2066 = vpop.xlane.xlu0 %2065
    %v2067 = vsel %vm130, %v2063, 0.0
    %2068 = vadd.xlane.f32.xlu0 %v2067
    %v2069 = vpop.xlane.xlu0 %2068
    %v2070 = vmul.f32 %v2066, %v956
    %v2071 = vmul.f32 %v2069, %v956
    %v2072 = vsub.f32 %v2062, %v2070
    %v2073 = vsub.f32 %v2063, %v2071
    %v2074 = vmul.f32 %v2072, %v2072
    %v2075 = vmul.f32 %v2073, %v2073
    %v2076 = vsel %vm130, %v2074, 0.0
    %2077 = vadd.xlane.f32.xlu0 %v2076
    %v2078 = vpop.xlane.xlu0 %2077
    %v2079 = vsel %vm130, %v2075, 0.0
    %2080 = vadd.xlane.f32.xlu0 %v2079
    %v2081 = vpop.xlane.xlu0 %2080
    %v2082 = vmul.f32 %v2078, %v956
    %v2083 = vmul.f32 %v2081, %v956
    %v2084 = vadd.f32 %v2082, 1e-05
    %v2085 = vadd.f32 %v2083, 1e-05
    %v2086 = vrsqrt.pop %v2084
    %v2087 = vmul.f32 %v2086, %v2084
    %v2088 = vmul.f32 %v2087, %v2086
    %v2089 = vmul.f32 0.5, %v2088
    %v2090 = vsub.f32 1.5, %v2089
    %v2091 = vmul.f32 %v2086, %v2090
    %vm2092 = vweird.f32 %v2084
    %vm2093 = vweird.f32 %v2086
    %vm2094 = vmor %vm2092, %vm2093
    %v2095 = vsel %vm2094, %v2086, %v2091
    %v2096 = vrsqrt.pop %v2085
    %v2097 = vmul.f32 %v2096, %v2085
    %v2098 = vmul.f32 %v2097, %v2096
    %v2099 = vmul.f32 0.5, %v2098
    %v2100 = vsub.f32 1.5, %v2099
    %v2101 = vmul.f32 %v2096, %v2100
    %vm2102 = vweird.f32 %v2085
    %vm2103 = vweird.f32 %v2096
    %vm2104 = vmor %vm2102, %vm2103
    %v2105 = vsel %vm2104, %v2096, %v2101
    %v2106 = vmul.f32 %v2072, %v2095
    %v2107 = vmul.f32 %v2073, %v2105
    %v2108 = vperm.slane %v1139, 0
    %v2109 = vmul.f32 %v2106, %v2108
    %v2110 = vmul.f32 %v2107, %v2108
    %v2111 = vperm.slane %v1140, 0
    %v2112 = vadd.f32 %v2109, %v2111
    %v2113 = vadd.f32 %v2110, %v2111
    %s2114 = scalar_lea.vmem [#allocation2], 256
    %v2115 = vld [vmem:[%s2114] sm:$0xff]
    %v2116 = vld [vmem:[%s2114 + $0x8] sm:$0xff]
    %v2117 = vld [vmem:[%s2114 + $0x10] sm:$0xff]
    %v2118 = vld [vmem:[%s2114 + $0x18] sm:$0xff]
    %v2119 = vld [vmem:[%s2114 + $0x20] sm:$0x1]
    %v2120 = vperm.slane %v2119, 0
    %v2122 = vsel %vm130, %v2112, 0
    %v2125 = vsel %vm130, %v2113, 0
    %2127 = vmatpush.msra.mxu0 0.0
    %2128 = vmatpush.msra.mxu0 0.0
    %2129 = vmatpush.msra.mxu0 0.0
    %2130 = vmatpush.msra.mxu0 0.0
    %2131 = vmatpush.msra.mxu0 0.0
    %2132 = vmatpush.msra.mxu0 0.0
    %2133 = vmatpush.msra.mxu0 0.0
    %2134 = vmatpush.msra.mxu0 0.0
    %2135 = vmatpush.msra.mxu0 0.0
    %2136 = vmatpush.msra.mxu0 0.0
    %2137 = vmatpush.msra.mxu0 0.0
    %2138 = vmatpush.msra.mxu0 0.0
    %2139 = vmatpush.msra.mxu0 %v2118
    %2140 = vmatpush.msra.mxu0 %v2117
    %2141 = vmatpush.msra.mxu0 %v2116
    %2142 = vmatpush.msra.mxu0 %v2115
    %2143 = vmatmul.f32.gmra.mxu0 %v2122
    %v2144 = vpop.f32.mrf.mxu0
    %v2145 = vadd.f32 %v2120, %v2144
    %2146 = vmatmul.f32.gmra.mxu0 %v2125
    %v2147 = vpop.f32.mrf.mxu0
    %v2148 = vadd.f32 %v2120, %v2147
    %2149 = vdwg.mxu0
    %2150 = vst [vmem:[%s5] sm:$0xff] %v2145
    %2151 = vst [vmem:[%s5 + $0x8] sm:$0xff] %v2148
    // Predicated region
    $region26: #{bert_language_model.1} parent=1 // pred_check
      _
    $region27: #{bert_language_model.1} parent=1 // pred_check_branch
      %2153 = sbr.rel (0) target = $region29
    $region28: #{bert_language_model.1} parent=1 // pred_region
      _
    $region29: #{bert_language_model.1} parent=1 // pred_fallthru
      _
    // Predicated region
    $region30: #{bert_language_model.1} parent=1 // pred_check
      _
    $region31: #{bert_language_model.1} parent=1 // pred_check_branch
      %2155 = sbr.rel (0) target = $region33
    $region32: #{bert_language_model.1} parent=1 // pred_region
      _
    $region33: #{bert_language_model.1} parent=1 // pred_fallthru
      _
    %2156 = vsyncpa [#allocation3], 1

</llo_original>
